<compile_context>
chip_gen: v6e
topology: v6e:2x2x1
jax: 0.10.0
libtpu: 0.0.40
codegen_flags: <defaults>
</compile_context>

<pallas_src>
import functools

import jax
import jax.numpy as jnp
from jax import lax
from jax.experimental import pallas as pl
from jax.experimental.pallas import tpu as pltpu


# ----------------------------------------------------------------------------
# Module definition (layer sizes of MLP_module_4_128)
# ----------------------------------------------------------------------------
_ENC_SIZES = [128, 64, 32, 16, 8, 4]      # MLP(in=128, out=4, num_cells=[64,32,16,8])
_DEC_SIZES = [4, 8, 16, 32, 64, 128]      # MLP(in=4, out=128, num_cells=[8,16,32,64])
_LAYER_DIMS = (list(zip(_ENC_SIZES[:-1], _ENC_SIZES[1:]))
               + list(zip(_DEC_SIZES[:-1], _DEC_SIZES[1:])))   # 10 layers
_NO_ACT = {4, 9}                          # last layer of each sub-MLP: no tanh

# Fused chain after folding layers 4 (8->4, no act) and 5 (4->8) into one 8->8.
_FOLDED_DIMS = _LAYER_DIMS[:4] + [(8, 8)] + _LAYER_DIMS[6:]    # 9 linears
_NUM_FUSED = len(_FOLDED_DIMS)


def _round_up(x, m):
    return ((x + m - 1) // m) * m


# Weight-slab row layout: fused layers 0..7 stored [out, in], last stored
# [in, out] = [64, 128].  Row blocks padded to multiples of 16 so every static
# slice start is sublane-aligned for packed bf16 ((16,128) tiles).
_W_ROWS_RAW = [d_out for (_, d_out) in _FOLDED_DIMS[:-1]] + [_FOLDED_DIMS[-1][0]]
_W_ROWS = [_round_up(r, 16) for r in _W_ROWS_RAW]
_W_OFF = [0]
for _r in _W_ROWS:
    _W_OFF.append(_W_OFF[-1] + _r)
_W_SLAB_ROWS = _W_OFF[-1]                 # 320
_B_SLAB_ROWS = 64                         # max hidden out-dim


# ----------------------------------------------------------------------------
# Kernel
# ----------------------------------------------------------------------------
def _bias_tanh(acc_f32, bias_f32, hidden_bf16):
    """Bias add + tanh on an f32 MXU accumulator (feature-major [out, tile])."""
    if hidden_bf16:
        # v6e/v7x: bf16-native VPU/EUP -> halves vreg traffic and EUP work,
        # and removes the separate f32->bf16 cast before the next matmul.
        return jnp.tanh(acc_f32.astype(jnp.bfloat16) + bias_f32.astype(jnp.bfloat16))
    # v5e and older: no bf16 VPU/EUP; keep elementwise math in f32.
    return jnp.tanh(acc_f32 + bias_f32)


def _mlp_chain_kernel(x_ref, w_ref, b_ref, blast_ref, out_ref, *, hidden_bf16):
    """Fused 9-linear chain.  Activations are feature-major ([features, tile])
    so the batch occupies the 128-lane axis for every narrow hidden layer."""
    x = x_ref[...].astype(jnp.bfloat16)                    # [tile, 128]

    # Layer 0 (128 -> 64): h[o, b] = sum_i w0[o, i] * x[b, i].  A @ B^T
    # (flash-attention pattern) -> no explicit transpose of the big activation.
    d_in, d_out = _FOLDED_DIMS[0]
    w0 = w_ref[_W_OFF[0]:_W_OFF[0] + d_out, :d_in]         # [64, 128] bf16
    acc = lax.dot_general(w0, x, (((1,), (1,)), ((), ())),
                          preferred_element_type=jnp.float32)   # [64, tile]
    h = _bias_tanh(acc, b_ref[:d_out, 0:1], hidden_bf16)

    # Hidden layers 1..7: standard (M,K)x(K,N) matmuls, lane-dense bias+tanh.
    for i in range(1, _NUM_FUSED - 1):
        d_in, d_out = _FOLDED_DIMS[i]
        w = w_ref[_W_OFF[i]:_W_OFF[i] + d_out, :d_in]      # [out, in] bf16
        rhs = h if hidden_bf16 else h.astype(jnp.bfloat16)
        acc = jnp.dot(w, rhs, preferred_element_type=jnp.float32)   # [out, tile]
        h = _bias_tanh(acc, b_ref[:d_out, i:i + 1], hidden_bf16)

    # Final layer (64 -> 128): out[b, o] = sum_i h[i, b] * w8[i, o] (A^T @ B);
    # the result lands directly in the lane-dense batch-major [tile, 128]
    # layout (unmasked 128-wide stores to HBM).
    i = _NUM_FUSED - 1
    d_in, d_out = _FOLDED_DIMS[i]
    w8 = w_ref[_W_OFF[i]:_W_OFF[i] + d_in, :d_out]         # [64, 128] bf16
    lhs = h if hidden_bf16 else h.astype(jnp.bfloat16)
    out = lax.dot_general(lhs, w8, (((0,), (0,)), ((), ())),
                          preferred_element_type=jnp.float32)   # [tile, 128]
    out_ref[...] = (out + blast_ref[...]).astype(out_ref.dtype)


# ----------------------------------------------------------------------------
# Parameter packing / wrapper
# ----------------------------------------------------------------------------
def prepare_params(params):
    """params: 10 (w, b) pairs, w stored [in, out] (== PyTorch weight.T), b [out].

    Returns (w_slab, b_slab, b_last):
      w_slab [320, 128] bf16 : all 9 folded weights; layers 0..7 as [out, in],
                               last as [in, out]; rows padded to multiples of
                               16, columns zero-padded to 128.
      b_slab [64, 8]    f32  : hidden-layer biases, column i = bias of fused
                               layer i (feature-major column vectors).
      b_last [1, 128]   f32  : final-layer bias (batch-major row vector).
    """
    ws = [jnp.asarray(w, jnp.float32) for (w, _) in params]
    bs = [jnp.asarray(b, jnp.float32) for (_, b) in params]

    # Fold layers 4 and 5 (no activation between them):
    #   (h @ W4 + b4) @ W5 + b5 == h @ (W4 @ W5) + (b4 @ W5 + b5)
    w45 = ws[4] @ ws[5]
    b45 = bs[4] @ ws[5] + bs[5]
    ws = ws[:4] + [w45] + ws[6:]
    bs = bs[:4] + [b45] + bs[6:]

    blocks = []
    for i, w in enumerate(ws):
        wt = w.T if i < _NUM_FUSED - 1 else w              # [out,in] / [in,out]
        blk = jnp.zeros((_W_ROWS[i], 128), jnp.float32)
        blk = blk.at[:wt.shape[0], :wt.shape[1]].set(wt)
        blocks.append(blk)
    w_slab = jnp.concatenate(blocks, axis=0).astype(jnp.bfloat16)   # [320, 128]

    b_cols = [jnp.pad(bs[i], (0, _B_SLAB_ROWS - bs[i].shape[0]))
              for i in range(_NUM_FUSED - 1)]
    b_slab = jnp.stack(b_cols, axis=1)                     # [64, 8] f32
    b_last = bs[-1].reshape(1, -1)                         # [1, 128] f32
    return w_slab, b_slab, b_last


def _choose_batch_tile(batch, *, cap=2048, multiple=256):
    """Large tiles amortize the ~0.35us/step grid overhead and the MXU
    latch/drain latency of the tiny-K matmuls; >= 2 grid steps keeps both v7x
    TensorCores fed.  256-row multiples satisfy v6e/v7x (and v5e's 128) MXU
    granularity; the 2048 cap keeps the double-buffered f32 I/O plus live
    intermediates well inside v7x's 64 MiB VMEM and v5e's scoped default."""
    half = -(-batch // 2)
    tile = _round_up(max(half, 1), multiple)
    return int(max(multiple, min(cap, tile)))


def _default_hidden_bf16():
    """Use bf16 bias+tanh only where the VPU/EUP are bf16-native (v6e / v7x)."""
    try:
        kind = jax.devices()[0].device_kind.lower()
    except Exception:
        return False
    return any(tag in kind for tag in ("v6", "v7", "7x"))


@functools.partial(jax.jit, static_argnames=("batch_tile", "hidden_bf16"))
def _mlp_forward(x, w_slab, b_slab, b_last, batch_tile, hidden_bf16):
    B, d_in = x.shape
    assert d_in == 128
    B_pad = _round_up(B, batch_tile)
    x_pad = x if B_pad == B else jnp.pad(x, ((0, B_pad - B), (0, 0)))
    grid = (B_pad // batch_tile,)

    in_specs = [
        pl.BlockSpec((batch_tile, 128), lambda i: (i, 0)),     # batch tile
        # Parameter slabs: full blocks with constant index maps -> fetched
        # once and VMEM-resident across all grid steps (3 DMAs instead of 18).
        pl.BlockSpec(w_slab.shape, lambda i: (0, 0)),
        pl.BlockSpec(b_slab.shape, lambda i: (0, 0)),
        pl.BlockSpec(b_last.shape, lambda i: (0, 0)),
    ]
    out_spec = pl.BlockSpec((batch_tile, 128), lambda i: (i, 0))

    # Raise the scoped-VMEM limit only when a very large tile actually needs
    # it (v5e scoped default is 16 MiB); stay <= 56 MiB for v7x's 64 MiB.
    est_bytes = 12 * batch_tile * 128 * 4
    vmem_limit = (int(min(56 * 2**20, max(32 * 2**20, est_bytes)))
                  if est_bytes > 14 * 2**20 else None)

    kernel = functools.partial(_mlp_chain_kernel, hidden_bf16=hidden_bf16)
    out = pl.pallas_call(
        kernel,
        out_shape=jax.ShapeDtypeStruct((B_pad, 128), x.dtype),
        grid_spec=pltpu.PrefetchScalarGridSpec(
            num_scalar_prefetch=0,
            grid=grid,
            in_specs=in_specs,
            out_specs=out_spec,
        ),
        compiler_params=pltpu.CompilerParams(
            dimension_semantics=("parallel",),
            vmem_limit_bytes=vmem_limit,
        ),
    )(x_pad, w_slab, b_slab, b_last)
    return out[:B] if B_pad != B else out


def mlp_module_4_128(x, prepped_params, *, batch_tile=None, hidden_bf16=None):
    """x: [B, 128] float32 -> [B, 128] float32."""
    w_slab, b_slab, b_last = prepped_params
    if batch_tile is None:
        batch_tile = _choose_batch_tile(x.shape[0])
    if hidden_bf16 is None:
        hidden_bf16 = _default_hidden_bf16()
    return _mlp_forward(x, w_slab, b_slab, b_last, batch_tile, hidden_bf16)


# ----------------------------------------------------------------------------
# Reference / init
# ----------------------------------------------------------------------------
def init_params(key):
    """nn.Linear-style init U(-1/sqrt(fan_in), 1/sqrt(fan_in)); w stored [in, out]."""
    params = []
    for (d_in, d_out) in _LAYER_DIMS:
        key, kw, kb = jax.random.split(key, 3)
        bound = 1.0 / jnp.sqrt(d_in)
        w = jax.random.uniform(kw, (d_in, d_out), jnp.float32, -bound, bound)
        b = jax.random.uniform(kb, (d_out,), jnp.float32, -bound, bound)
        params.append((w, b))
    return params


def reference_forward(x, params, *, matmul_dtype=jnp.float32, hidden_dtype=jnp.float32):
    """Pure-JAX reference of the unfused 10-layer chain.  Set matmul_dtype /
    hidden_dtype to bfloat16 to mirror the kernel's MXU-input / hidden-math
    precision (f32 accumulation either way)."""
    h = x
    for i, (w, b) in enumerate(params):
        acc = jnp.dot(h.astype(matmul_dtype), w.astype(matmul_dtype),
                      preferred_element_type=jnp.float32)
        if i in _NO_ACT:
            h = acc + b
        else:
            h = jnp.tanh(acc.astype(hidden_dtype) + b.astype(hidden_dtype))
    return h.astype(jnp.float32)


if __name__ == "__main__":
    key = jax.random.PRNGKey(0)
    key, k1, k2 = jax.random.split(key, 3)
    params = init_params(key)
    prepped = prepare_params(params)
    hidden_bf16 = _default_hidden_bf16()
    hidden_dtype = jnp.bfloat16 if hidden_bf16 else jnp.float32

    # Two batch sizes: one exercising padding + the small-tile path, one
    # exercising the adaptive large tile with a 2-step "parallel" grid.
    for kx, B in ((k1, 500), (k2, 2048)):
        x = jax.random.normal(kx, (B, 128), dtype=jnp.float32)
        out = jax.block_until_ready(mlp_module_4_128(x, prepped))
        assert out.shape == (B, 128), out.shape

        # Reference mirroring the kernel's precision path (layer fold and
        # accumulation-order differences stay well below tolerance).
        ref = reference_forward(x, params, matmul_dtype=jnp.bfloat16,
                                hidden_dtype=hidden_dtype)
        err = float(jnp.max(jnp.abs(out - ref)))
        assert err < 2e-2, f"B={B}: mismatch vs mirrored reference, max err {err}"

        # Loose sanity check against the full-f32 reference.
        ref32 = reference_forward(x, params)
        err32 = float(jnp.max(jnp.abs(out - ref32)))
        assert err32 < 1e-1, f"B={B}: mismatch vs f32 reference, max err {err32}"

    print("KERNEL_OK")
</pallas_src>

<mosaic_0001>
module attributes {stable_mosaic.version = 11 : i64} {
  func.func @_mlp_chain_kernel(%arg0: i32, %arg1: memref<256x128xf32, #tpu.memory_space<vmem>>, %arg2: memref<320x128xbf16, #tpu.memory_space<vmem>>, %arg3: memref<64x8xf32, #tpu.memory_space<vmem>>, %arg4: memref<1x128xf32, #tpu.memory_space<vmem>>, %arg5: memref<256x128xf32, #tpu.memory_space<vmem>>) attributes {dimension_semantics = [#tpu.dimension_semantics<parallel>], iteration_bounds = array<i64: 2>, scalar_prefetch = 0 : i64, scratch_operands = 0 : i64, tpu.core_type = #tpu.core_type<tc>, window_params = [{transform_indices = @transform_0, window_bounds = array<i64: 256, 128>}, {pipeline_mode = #tpu.pipeline_mode<synchronous>, transform_indices = @transform_1, window_bounds = array<i64: 320, 128>}, {pipeline_mode = #tpu.pipeline_mode<synchronous>, transform_indices = @transform_2, window_bounds = array<i64: 64, 8>}, {pipeline_mode = #tpu.pipeline_mode<synchronous>, transform_indices = @transform_3, window_bounds = array<i64: 1, 128>}, {transform_indices = @transform_4, window_bounds = array<i64: 256, 128>}]} {
    %c0 = arith.constant 0 : index
    %c0_0 = arith.constant 0 : index
    %0 = vector.load %arg1[%c0, %c0_0] : memref<256x128xf32, #tpu.memory_space<vmem>>, vector<256x128xf32>
    %1 = arith.truncf %0 : vector<256x128xf32> to vector<256x128xbf16>
    %c0_1 = arith.constant 0 : index
    %c0_2 = arith.constant 0 : index
    %2 = vector.load %arg2[%c0_1, %c0_2] : memref<320x128xbf16, #tpu.memory_space<vmem>>, vector<64x128xbf16>
    %cst = arith.constant dense<0.000000e+00> : vector<64x256xf32>
    %3 = tpu.matmul %2, %1, %cst {dimension_numbers = #tpu.dot_dimension_numbers<[1], [1], [0], [0], [0, 0, 1, 0], [], []>} : vector<64x128xbf16>, vector<256x128xbf16>, vector<64x256xf32> -> vector<64x256xf32>
    %c0_3 = arith.constant 0 : index
    %c0_4 = arith.constant 0 : index
    %4 = vector.load %arg3[%c0_3, %c0_4] : memref<64x8xf32, #tpu.memory_space<vmem>>, vector<64x1xf32>
    %5 = vector.broadcast %4 : vector<64x1xf32> to vector<64x256xf32>
    %6 = arith.addf %3, %5 : vector<64x256xf32>
    %7 = math.tanh %6 : vector<64x256xf32>
    %c64 = arith.constant 64 : index
    %c0_5 = arith.constant 0 : index
    %8 = vector.load %arg2[%c64, %c0_5] : memref<320x128xbf16, #tpu.memory_space<vmem>>, vector<32x64xbf16>
    %9 = arith.truncf %7 : vector<64x256xf32> to vector<64x256xbf16>
    %cst_6 = arith.constant dense<0.000000e+00> : vector<32x256xf32>
    %10 = tpu.matmul %8, %9, %cst_6 {dimension_numbers = #tpu.dot_dimension_numbers<[1], [0], [0], [1], [0, 0, 1, 1], [], []>} : vector<32x64xbf16>, vector<64x256xbf16>, vector<32x256xf32> -> vector<32x256xf32>
    %c0_7 = arith.constant 0 : index
    %c1 = arith.constant 1 : index
    %11 = vector.load %arg3[%c0_7, %c1] : memref<64x8xf32, #tpu.memory_space<vmem>>, vector<32x1xf32>
    %12 = vector.broadcast %11 : vector<32x1xf32> to vector<32x256xf32>
    %13 = arith.addf %10, %12 : vector<32x256xf32>
    %14 = math.tanh %13 : vector<32x256xf32>
    %c96 = arith.constant 96 : index
    %c0_8 = arith.constant 0 : index
    %15 = vector.load %arg2[%c96, %c0_8] : memref<320x128xbf16, #tpu.memory_space<vmem>>, vector<16x32xbf16>
    %16 = arith.truncf %14 : vector<32x256xf32> to vector<32x256xbf16>
    %cst_9 = arith.constant dense<0.000000e+00> : vector<16x256xf32>
    %17 = tpu.matmul %15, %16, %cst_9 {dimension_numbers = #tpu.dot_dimension_numbers<[1], [0], [0], [1], [0, 0, 1, 1], [], []>} : vector<16x32xbf16>, vector<32x256xbf16>, vector<16x256xf32> -> vector<16x256xf32>
    %c0_10 = arith.constant 0 : index
    %c2 = arith.constant 2 : index
    %18 = vector.load %arg3[%c0_10, %c2] : memref<64x8xf32, #tpu.memory_space<vmem>>, vector<16x1xf32>
    %19 = vector.broadcast %18 : vector<16x1xf32> to vector<16x256xf32>
    %20 = arith.addf %17, %19 : vector<16x256xf32>
    %21 = math.tanh %20 : vector<16x256xf32>
    %c112 = arith.constant 112 : index
    %c0_11 = arith.constant 0 : index
    %22 = vector.load %arg2[%c112, %c0_11] : memref<320x128xbf16, #tpu.memory_space<vmem>>, vector<8x16xbf16>
    %23 = arith.truncf %21 : vector<16x256xf32> to vector<16x256xbf16>
    %cst_12 = arith.constant dense<0.000000e+00> : vector<8x256xf32>
    %24 = tpu.matmul %22, %23, %cst_12 {dimension_numbers = #tpu.dot_dimension_numbers<[1], [0], [0], [1], [0, 0, 1, 1], [], []>} : vector<8x16xbf16>, vector<16x256xbf16>, vector<8x256xf32> -> vector<8x256xf32>
    %c0_13 = arith.constant 0 : index
    %c3 = arith.constant 3 : index
    %25 = vector.load %arg3[%c0_13, %c3] : memref<64x8xf32, #tpu.memory_space<vmem>>, vector<8x1xf32>
    %26 = vector.broadcast %25 : vector<8x1xf32> to vector<8x256xf32>
    %27 = arith.addf %24, %26 : vector<8x256xf32>
    %28 = math.tanh %27 : vector<8x256xf32>
    %c128 = arith.constant 128 : index
    %c0_14 = arith.constant 0 : index
    %29 = vector.load %arg2[%c128, %c0_14] : memref<320x128xbf16, #tpu.memory_space<vmem>>, vector<8x8xbf16>
    %30 = arith.truncf %28 : vector<8x256xf32> to vector<8x256xbf16>
    %cst_15 = arith.constant dense<0.000000e+00> : vector<8x256xf32>
    %31 = tpu.matmul %29, %30, %cst_15 {dimension_numbers = #tpu.dot_dimension_numbers<[1], [0], [0], [1], [0, 0, 1, 1], [], []>} : vector<8x8xbf16>, vector<8x256xbf16>, vector<8x256xf32> -> vector<8x256xf32>
    %c0_16 = arith.constant 0 : index
    %c4 = arith.constant 4 : index
    %32 = vector.load %arg3[%c0_16, %c4] : memref<64x8xf32, #tpu.memory_space<vmem>>, vector<8x1xf32>
    %33 = vector.broadcast %32 : vector<8x1xf32> to vector<8x256xf32>
    %34 = arith.addf %31, %33 : vector<8x256xf32>
    %35 = math.tanh %34 : vector<8x256xf32>
    %c144 = arith.constant 144 : index
    %c0_17 = arith.constant 0 : index
    %36 = vector.load %arg2[%c144, %c0_17] : memref<320x128xbf16, #tpu.memory_space<vmem>>, vector<16x8xbf16>
    %37 = arith.truncf %35 : vector<8x256xf32> to vector<8x256xbf16>
    %cst_18 = arith.constant dense<0.000000e+00> : vector<16x256xf32>
    %38 = tpu.matmul %36, %37, %cst_18 {dimension_numbers = #tpu.dot_dimension_numbers<[1], [0], [0], [1], [0, 0, 1, 1], [], []>} : vector<16x8xbf16>, vector<8x256xbf16>, vector<16x256xf32> -> vector<16x256xf32>
    %c0_19 = arith.constant 0 : index
    %c5 = arith.constant 5 : index
    %39 = vector.load %arg3[%c0_19, %c5] : memref<64x8xf32, #tpu.memory_space<vmem>>, vector<16x1xf32>
    %40 = vector.broadcast %39 : vector<16x1xf32> to vector<16x256xf32>
    %41 = arith.addf %38, %40 : vector<16x256xf32>
    %42 = math.tanh %41 : vector<16x256xf32>
    %c160 = arith.constant 160 : index
    %c0_20 = arith.constant 0 : index
    %43 = vector.load %arg2[%c160, %c0_20] : memref<320x128xbf16, #tpu.memory_space<vmem>>, vector<32x16xbf16>
    %44 = arith.truncf %42 : vector<16x256xf32> to vector<16x256xbf16>
    %cst_21 = arith.constant dense<0.000000e+00> : vector<32x256xf32>
    %45 = tpu.matmul %43, %44, %cst_21 {dimension_numbers = #tpu.dot_dimension_numbers<[1], [0], [0], [1], [0, 0, 1, 1], [], []>} : vector<32x16xbf16>, vector<16x256xbf16>, vector<32x256xf32> -> vector<32x256xf32>
    %c0_22 = arith.constant 0 : index
    %c6 = arith.constant 6 : index
    %46 = vector.load %arg3[%c0_22, %c6] : memref<64x8xf32, #tpu.memory_space<vmem>>, vector<32x1xf32>
    %47 = vector.broadcast %46 : vector<32x1xf32> to vector<32x256xf32>
    %48 = arith.addf %45, %47 : vector<32x256xf32>
    %49 = math.tanh %48 : vector<32x256xf32>
    %c192 = arith.constant 192 : index
    %c0_23 = arith.constant 0 : index
    %50 = vector.load %arg2[%c192, %c0_23] : memref<320x128xbf16, #tpu.memory_space<vmem>>, vector<64x32xbf16>
    %51 = arith.truncf %49 : vector<32x256xf32> to vector<32x256xbf16>
    %cst_24 = arith.constant dense<0.000000e+00> : vector<64x256xf32>
    %52 = tpu.matmul %50, %51, %cst_24 {dimension_numbers = #tpu.dot_dimension_numbers<[1], [0], [0], [1], [0, 0, 1, 1], [], []>} : vector<64x32xbf16>, vector<32x256xbf16>, vector<64x256xf32> -> vector<64x256xf32>
    %c0_25 = arith.constant 0 : index
    %c7 = arith.constant 7 : index
    %53 = vector.load %arg3[%c0_25, %c7] : memref<64x8xf32, #tpu.memory_space<vmem>>, vector<64x1xf32>
    %54 = vector.broadcast %53 : vector<64x1xf32> to vector<64x256xf32>
    %55 = arith.addf %52, %54 : vector<64x256xf32>
    %56 = math.tanh %55 : vector<64x256xf32>
    %c256 = arith.constant 256 : index
    %c0_26 = arith.constant 0 : index
    %57 = vector.load %arg2[%c256, %c0_26] : memref<320x128xbf16, #tpu.memory_space<vmem>>, vector<64x128xbf16>
    %58 = arith.truncf %56 : vector<64x256xf32> to vector<64x256xbf16>
    %cst_27 = arith.constant dense<0.000000e+00> : vector<256x128xf32>
    %59 = tpu.matmul %58, %57, %cst_27 {dimension_numbers = #tpu.dot_dimension_numbers<[0], [0], [1], [1], [0, 1, 1, 1], [], []>} : vector<64x256xbf16>, vector<64x128xbf16>, vector<256x128xf32> -> vector<256x128xf32>
    %c0_28 = arith.constant 0 : index
    %c0_29 = arith.constant 0 : index
    %60 = vector.load %arg4[%c0_28, %c0_29] : memref<1x128xf32, #tpu.memory_space<vmem>>, vector<1x128xf32>
    %61 = vector.broadcast %60 : vector<1x128xf32> to vector<256x128xf32>
    %62 = arith.addf %59, %61 : vector<256x128xf32>
    %c0_30 = arith.constant 0 : index
    %c0_31 = arith.constant 0 : index
    %63 = vector.load %arg5[%c0_30, %c0_31] : memref<256x128xf32, #tpu.memory_space<vmem>>, vector<256x128xf32>
    tpu.vector_store %arg5[%c0_30, %c0_31], %62 {strides = array<i32>} : memref<256x128xf32, #tpu.memory_space<vmem>>, vector<256x128xf32>,
    return
  }
  func.func @transform_0(%arg0: i32) -> (i32, i32) {
    %c0_i32 = arith.constant 0 : i32
    %c0_i32_0 = arith.constant 0 : i32
    return %arg0, %c0_i32 : i32, i32
  }
  func.func @transform_1(%arg0: i32) -> (i32, i32) {
    %c0_i32 = arith.constant 0 : i32
    %c0_i32_0 = arith.constant 0 : i32
    %c0_i32_1 = arith.constant 0 : i32
    return %c0_i32, %c0_i32_0 : i32, i32
  }
  func.func @transform_2(%arg0: i32) -> (i32, i32) {
    %c0_i32 = arith.constant 0 : i32
    %c0_i32_0 = arith.constant 0 : i32
    %c0_i32_1 = arith.constant 0 : i32
    return %c0_i32, %c0_i32_0 : i32, i32
  }
  func.func @transform_3(%arg0: i32) -> (i32, i32) {
    %c0_i32 = arith.constant 0 : i32
    %c0_i32_0 = arith.constant 0 : i32
    %c0_i32_1 = arith.constant 0 : i32
    return %c0_i32, %c0_i32_0 : i32, i32
  }
  func.func @transform_4(%arg0: i32) -> (i32, i32) {
    %c0_i32 = arith.constant 0 : i32
    %c0_i32_0 = arith.constant 0 : i32
    return %arg0, %c0_i32 : i32, i32
  }
}

</mosaic_0001>

<llo_original>
// kernel: _mlp_forward.1
$region0: #{_mlp_forward.1}
  #allocation0 [shape = 'u32[]', space=smem, size = 0x4, offset = 0x4, fixed_abs, tag = 'smem constant byte address 0x4 - core index']
  #allocation1 [shape = 'u32[144,128]{1,0:T(1,128)}', space=vmem, size = 0x12000, scoped, tag = 'internal scratch']
  %s0 = inlined_call_operand.vmem [shape: f32[512,128], index: 0, kind: input, shape index: {}]
  %s1 = inlined_call_operand.vmem [shape: bf16[320,128], index: 1, kind: input, shape index: {}]
  %s2 = inlined_call_operand.vmem [shape: f32[64,8], index: 2, kind: input, shape index: {}]
  %s3 = inlined_call_operand.vmem [shape: f32[1,128], index: 3, kind: input, shape index: {}]
  %s4 = inlined_call_operand.vmem [shape: f32[512,128], index: 4, kind: output, shape index: {}]
  %s5 = sld [smem:[#allocation0]]
  $region49: #{_mlp_forward.1} parent=0
    _
  %s7 = ssub.s32 1, %s5
  %s8 = scalar_select 0, %s7, %s5
  loop: start=0, step=1, limit=4
  $region2: #{_mlp_forward.1} parent=0 // loop_pre_header
    _
  $region3: #{_mlp_forward.1} parent=0 // loop_header
    %s10 = sphi 0, %s14
    %p11 = scmp.ge.s32.totalorder %s10, 4
    %s20 = sphi 0, %s22
    %s23 = sphi 0, %s20
    %s24 = sphi 0, %s23
    %s40 = sphi 0, %s24
    %s44 = sphi 0, %s44
    %s46 = sphi 0, %s44
    %s47 = sphi 0, %s46
    %s61 = sphi 0, %s47
    %s65 = sphi 0, %s65
    %s67 = sphi 0, %s65
    %s68 = sphi 0, %s67
    %s82 = sphi 0, %s68
    %s86 = sphi 0, %s86
    %s88 = sphi 0, %s86
    %s89 = sphi 0, %s88
    %s103 = sphi 0, %s89
    %s109 = sphi 0, %s111
    %s112 = sphi 0, %s109
    %s113 = sphi 0, %s112
    %s129 = sphi 0, %s113
  $region4: #{_mlp_forward.1} parent=0 // loop_header_branch
    %13 = sbr.rel (%p11) target = $region8
  $region5: #{_mlp_forward.1} parent=0 // loop_body
    %s15 = ssub.s32 %s10, 1
    %s16 = ssub.s32 %s10, 2
    %s17 = sadd.s32 %s10, 1
    %s18 = ssub.s32 %s10, %s17
    %p19 = scmp.eq.s32.totalorder %s18, 0
    %s21 = sadd.s32 %s20, 1
    %s22 = scalar_select %p19, %s20, %s21
    %p25 = pneg %p19
    %p26 = scmp.eq.s32.totalorder %s10, 1
    %p27 = por %p25, %p26
    %p28 = scmp.ne.s32.totalorder %s20, %s23
    %p29 = scmp.eq.s32.totalorder %s10, 0
    %p30 = por %p28, %p29
    %p31 = scmp.ne.s32.totalorder %s20, %s23
    %p32 = scmp.eq.s32.totalorder %s15, 1
    %p33 = por %p31, %p32
    %p34 = scmp.ne.s32.totalorder %s23, %s24
    %p35 = scmp.eq.s32.totalorder %s15, 0
    %p36 = por %p34, %p35
    %p37 = scmp.ne.s32.totalorder %s23, %s24
    %p38 = scmp.eq.s32.totalorder %s16, 1
    %p39 = por %p37, %p38
    %p41 = scmp.ne.s32.totalorder %s24, %s40
    %p42 = scmp.eq.s32.totalorder %s16, 0
    %p43 = por %p41, %p42
    %s45 = sadd.s32 %s44, 1
    %p48 = scmp.eq.s32.totalorder %s10, 1
    %p49 = scmp.ne.s32.totalorder %s44, %s46
    %p50 = scmp.eq.s32.totalorder %s10, 0
    %p51 = por %p49, %p50
    %p52 = scmp.ne.s32.totalorder %s44, %s46
    %p53 = scmp.eq.s32.totalorder %s15, 1
    %p54 = por %p52, %p53
    %p55 = scmp.ne.s32.totalorder %s46, %s47
    %p56 = scmp.eq.s32.totalorder %s15, 0
    %p57 = por %p55, %p56
    %p58 = scmp.ne.s32.totalorder %s46, %s47
    %p59 = scmp.eq.s32.totalorder %s16, 1
    %p60 = por %p58, %p59
    %p62 = scmp.ne.s32.totalorder %s47, %s61
    %p63 = scmp.eq.s32.totalorder %s16, 0
    %p64 = por %p62, %p63
    %s66 = sadd.s32 %s65, 1
    %p69 = scmp.eq.s32.totalorder %s10, 1
    %p70 = scmp.ne.s32.totalorder %s65, %s67
    %p71 = scmp.eq.s32.totalorder %s10, 0
    %p72 = por %p70, %p71
    %p73 = scmp.ne.s32.totalorder %s65, %s67
    %p74 = scmp.eq.s32.totalorder %s15, 1
    %p75 = por %p73, %p74
    %p76 = scmp.ne.s32.totalorder %s67, %s68
    %p77 = scmp.eq.s32.totalorder %s15, 0
    %p78 = por %p76, %p77
    %p79 = scmp.ne.s32.totalorder %s67, %s68
    %p80 = scmp.eq.s32.totalorder %s16, 1
    %p81 = por %p79, %p80
    %p83 = scmp.ne.s32.totalorder %s68, %s82
    %p84 = scmp.eq.s32.totalorder %s16, 0
    %p85 = por %p83, %p84
    %s87 = sadd.s32 %s86, 1
    %p90 = scmp.eq.s32.totalorder %s10, 1
    %p91 = scmp.ne.s32.totalorder %s86, %s88
    %p92 = scmp.eq.s32.totalorder %s10, 0
    %p93 = por %p91, %p92
    %p94 = scmp.ne.s32.totalorder %s86, %s88
    %p95 = scmp.eq.s32.totalorder %s15, 1
    %p96 = por %p94, %p95
    %p97 = scmp.ne.s32.totalorder %s88, %s89
    %p98 = scmp.eq.s32.totalorder %s15, 0
    %p99 = por %p97, %p98
    %p100 = scmp.ne.s32.totalorder %s88, %s89
    %p101 = scmp.eq.s32.totalorder %s16, 1
    %p102 = por %p100, %p101
    %p104 = scmp.ne.s32.totalorder %s89, %s103
    %p105 = scmp.eq.s32.totalorder %s16, 0
    %p106 = por %p104, %p105
    %s107 = ssub.s32 %s10, %s17
    %p108 = scmp.eq.s32.totalorder %s107, 0
    %s110 = sadd.s32 %s109, 1
    %s111 = scalar_select %p108, %s109, %s110
    %p114 = pneg %p108
    %p115 = scmp.eq.s32.totalorder %s10, 1
    %p116 = por %p114, %p115
    %p117 = scmp.ne.s32.totalorder %s109, %s112
    %p118 = scmp.eq.s32.totalorder %s10, 0
    %p119 = por %p117, %p118
    %p120 = scmp.ne.s32.totalorder %s109, %s112
    %p121 = scmp.eq.s32.totalorder %s15, 1
    %p122 = por %p120, %p121
    %p123 = scmp.ne.s32.totalorder %s112, %s113
    %p124 = scmp.eq.s32.totalorder %s15, 0
    %p125 = por %p123, %p124
    %p126 = scmp.ne.s32.totalorder %s112, %s113
    %p127 = scmp.eq.s32.totalorder %s16, 1
    %p128 = por %p126, %p127
    %p130 = scmp.ne.s32.totalorder %s113, %s129
    %p131 = scmp.eq.s32.totalorder %s16, 0
    %p132 = por %p130, %p131
    %p133 = scmp.le.s32.totalorder 1, %s10
    %p134 = scmp.lt.s32.totalorder %s10, 3
    %p135 = pnand %p133, %p134
    %p136 = pneg %p135
    // Predicated region
    $region9: #{_mlp_forward.1} parent=5 // pred_check
      _
    $region10: #{_mlp_forward.1} parent=5 // pred_check_branch
      %138 = sbr.rel (%p135) target = $region12
    $region11: #{_mlp_forward.1} parent=5 // pred_region
      %s139 = ssub.s32 %s10, 1
      // Predicated region
      $region13: #{_mlp_forward.1} parent=11 // pred_check
        %p140 = pneg %p57
      $region14: #{_mlp_forward.1} parent=11 // pred_check_branch
        %142 = sbr.rel (%p140) target = $region16
      $region15: #{_mlp_forward.1} parent=11 // pred_region
        _
      $region16: #{_mlp_forward.1} parent=11 // pred_fallthru
        _
      // Predicated region
      $region17: #{_mlp_forward.1} parent=11 // pred_check
        %p143 = pneg %p78
      $region18: #{_mlp_forward.1} parent=11 // pred_check_branch
        %145 = sbr.rel (%p143) target = $region20
      $region19: #{_mlp_forward.1} parent=11 // pred_region
        _
      $region20: #{_mlp_forward.1} parent=11 // pred_fallthru
        _
      // Predicated region
      $region21: #{_mlp_forward.1} parent=11 // pred_check
        %p146 = pneg %p99
      $region22: #{_mlp_forward.1} parent=11 // pred_check_branch
        %148 = sbr.rel (%p146) target = $region24
      $region23: #{_mlp_forward.1} parent=11 // pred_region
        _
      $region24: #{_mlp_forward.1} parent=11 // pred_fallthru
        _
    $region12: #{_mlp_forward.1} parent=5 // pred_fallthru
      _
    %p149 = scmp.lt.s32.totalorder %s10, 2
    // Predicated region
    $region25: #{_mlp_forward.1} parent=5 // pred_check
      %p150 = pneg %p149
    $region26: #{_mlp_forward.1} parent=5 // pred_check_branch
      %152 = sbr.rel (%p150) target = $region28
    $region27: #{_mlp_forward.1} parent=5 // pred_region
      // Predicated region
      $region29: #{_mlp_forward.1} parent=27 // pred_check
        %p153 = pneg %p30
      $region30: #{_mlp_forward.1} parent=27 // pred_check_branch
        %155 = sbr.rel (%p153) target = $region32
      $region31: #{_mlp_forward.1} parent=27 // pred_region
        %s156 = smul.u32 32, %s10
        %p157 = scmp.lt.s32.totalorder %s156, 63
        %s158 = scalar_select %p157, %s156, 63
        %s159 = smul.addr %s158, 8
        %s160 = scalar_lea.vmem %s0, %s159
        %s161 = smul.u32 32, %s10
      $region32: #{_mlp_forward.1} parent=27 // pred_fallthru
        _
    $region28: #{_mlp_forward.1} parent=5 // pred_fallthru
      _
    %p162 = scmp.le.s32.totalorder 1, %s10
    %p163 = scmp.lt.s32.totalorder %s10, 3
    %p164 = pnand %p162, %p163
    %p165 = pneg %p164
    // Predicated region
    $region33: #{_mlp_forward.1} parent=5 // pred_check
      _
    $region34: #{_mlp_forward.1} parent=5 // pred_check_branch
      %167 = sbr.rel (%p164) target = $region36
    $region35: #{_mlp_forward.1} parent=5 // pred_region
      %s168 = ssub.s32 %s10, 1
      %s169 = smul.u32 32, %s15
      %p170 = scmp.lt.s32.totalorder %s169, 63
      %s171 = scalar_select %p170, %s169, 63
      %s172 = smul.addr %s171, 8
      %s173 = scalar_lea.vmem %s0, %s172
      %p174 = pneg %p36
      %p175 = pneg %p33
      %p176 = pneg %p57
      %p177 = pneg %p54
      %p178 = pneg %p78
      %p179 = pneg %p75
      %p180 = pneg %p99
      %p181 = pneg %p96
      %p182 = pneg %p125
      %p183 = pneg %p122
      %s184 = smul.u32 32, %s15
      %p185 = scmp.lt.s32.totalorder %s184, 63
      %s186 = scalar_select %p185, %s184, 63
      %s187 = smul.addr %s186, 8
      %s188 = scalar_lea.vmem %s4, %s187
      %s189 = smul.u32 32, %s15
      %p190 = scmp.lt.s32.totalorder %s189, 63
      %s191 = scalar_select %p190, %s189, 63
      %s192 = smul.addr %s191, 8
      %s193 = scalar_lea.vmem %s0, %s192
      %s194 = smul.u32 32, %s15
      %s195 = smul.u32 32, %s15
      %p196 = scmp.lt.s32.totalorder %s195, 63
      %s197 = scalar_select %p196, %s195, 63
      %s198 = smul.addr %s197, 8
      %s199 = scalar_lea.vmem %s4, %s198
      %s200 = smul.u32 32, %s15
      %v202 = vld [vmem:[%s193] sm:$0xff]
      %v203 = vld [vmem:[%s193 + $0x8] sm:$0xff]
      %v204 = vld [vmem:[%s193 + $0x10] sm:$0xff]
      %v205 = vld [vmem:[%s193 + $0x18] sm:$0xff]
      %v206 = vld [vmem:[%s193 + $0x20] sm:$0xff]
      %v207 = vld [vmem:[%s193 + $0x28] sm:$0xff]
      %v208 = vld [vmem:[%s193 + $0x30] sm:$0xff]
      %v209 = vld [vmem:[%s193 + $0x38] sm:$0xff]
      %v210 = vld [vmem:[%s193 + $0x40] sm:$0xff]
      %v211 = vld [vmem:[%s193 + $0x48] sm:$0xff]
      %v212 = vld [vmem:[%s193 + $0x50] sm:$0xff]
      %v213 = vld [vmem:[%s193 + $0x58] sm:$0xff]
      %v214 = vld [vmem:[%s193 + $0x60] sm:$0xff]
      %v215 = vld [vmem:[%s193 + $0x68] sm:$0xff]
      %v216 = vld [vmem:[%s193 + $0x70] sm:$0xff]
      %v217 = vld [vmem:[%s193 + $0x78] sm:$0xff]
      %v218 = vld [vmem:[%s193 + $0x80] sm:$0xff]
      %v219 = vld [vmem:[%s193 + $0x88] sm:$0xff]
      %v220 = vld [vmem:[%s193 + $0x90] sm:$0xff]
      %v221 = vld [vmem:[%s193 + $0x98] sm:$0xff]
      %v222 = vld [vmem:[%s193 + $0xa0] sm:$0xff]
      %v223 = vld [vmem:[%s193 + $0xa8] sm:$0xff]
      %v224 = vld [vmem:[%s193 + $0xb0] sm:$0xff]
      %v225 = vld [vmem:[%s193 + $0xb8] sm:$0xff]
      %v226 = vld [vmem:[%s193 + $0xc0] sm:$0xff]
      %v227 = vld [vmem:[%s193 + $0xc8] sm:$0xff]
      %v228 = vld [vmem:[%s193 + $0xd0] sm:$0xff]
      %v229 = vld [vmem:[%s193 + $0xd8] sm:$0xff]
      %v230 = vld [vmem:[%s193 + $0xe0] sm:$0xff]
      %v231 = vld [vmem:[%s193 + $0xe8] sm:$0xff]
      %v232 = vld [vmem:[%s193 + $0xf0] sm:$0xff]
      %v233 = vld [vmem:[%s193 + $0xf8] sm:$0xff]
      %v234 = vpack.c.bf16 %v203, %v202
      %v235 = vpack.c.bf16 %v205, %v204
      %v236 = vpack.c.bf16 %v207, %v206
      %v237 = vpack.c.bf16 %v209, %v208
      %v238 = vpack.c.bf16 %v211, %v210
      %v239 = vpack.c.bf16 %v213, %v212
      %v240 = vpack.c.bf16 %v215, %v214
      %v241 = vpack.c.bf16 %v217, %v216
      %v242 = vpack.c.bf16 %v219, %v218
      %v243 = vpack.c.bf16 %v221, %v220
      %v244 = vpack.c.bf16 %v223, %v222
      %v245 = vpack.c.bf16 %v225, %v224
      %v246 = vpack.c.bf16 %v227, %v226
      %v247 = vpack.c.bf16 %v229, %v228
      %v248 = vpack.c.bf16 %v231, %v230
      %v249 = vpack.c.bf16 %v233, %v232
      %v250 = vld [vmem:[%s1] sm:$0xf]
      %v251 = vld [vmem:[%s1 + $0x4] sm:$0xf]
      %v252 = vld [vmem:[%s1 + $0x8] sm:$0xf]
      %v253 = vld [vmem:[%s1 + $0xc] sm:$0xf]
      %v254 = vld [vmem:[%s1 + $0x10] sm:$0xf]
      %v255 = vld [vmem:[%s1 + $0x14] sm:$0xf]
      %v256 = vld [vmem:[%s1 + $0x18] sm:$0xf]
      %v257 = vld [vmem:[%s1 + $0x1c] sm:$0xf]
      %v258 = vld [vmem:[%s2] sm:$0xff]
      %v259 = vld [vmem:[%s2 + $0x8] sm:$0xff]
      %v260 = vld [vmem:[%s2 + $0x10] sm:$0xff]
      %v261 = vld [vmem:[%s2 + $0x18] sm:$0xff]
      %v262 = vld [vmem:[%s2 + $0x20] sm:$0xff]
      %v263 = vld [vmem:[%s2 + $0x28] sm:$0xff]
      %v264 = vld [vmem:[%s2 + $0x30] sm:$0xff]
      %v265 = vld [vmem:[%s2 + $0x38] sm:$0xff]
      %267 = vset.pattern.permute.xlu0 0
      %268 = vperm.xlu0 %267, %v258
      %v269 = vpop.permute.xlu0 %268
      %272 = vset.pattern.permute.xlu0 0
      %273 = vperm.xlu0 %272, %v259
      %v274 = vpop.permute.xlu0 %273
      %277 = vset.pattern.permute.xlu0 0
      %278 = vperm.xlu0 %277, %v260
      %v279 = vpop.permute.xlu0 %278
      %282 = vset.pattern.permute.xlu0 0
      %283 = vperm.xlu0 %282, %v261
      %v284 = vpop.permute.xlu0 %283
      %287 = vset.pattern.permute.xlu0 0
      %288 = vperm.xlu0 %287, %v262
      %v289 = vpop.permute.xlu0 %288
      %292 = vset.pattern.permute.xlu0 0
      %293 = vperm.xlu0 %292, %v263
      %v294 = vpop.permute.xlu0 %293
      %297 = vset.pattern.permute.xlu0 0
      %298 = vperm.xlu0 %297, %v264
      %v299 = vpop.permute.xlu0 %298
      %302 = vset.pattern.permute.xlu0 0
      %303 = vperm.xlu0 %302, %v265
      %v304 = vpop.permute.xlu0 %303
      %v314 = vunpack.c.l.b16 %v250
      %v315 = vunpack.c.l.b16 %v251
      %v316 = vunpack.c.l.b16 %v252
      %v317 = vunpack.c.l.b16 %v253
      %v318 = vunpack.c.l.b16 %v254
      %v319 = vunpack.c.l.b16 %v255
      %v320 = vunpack.c.l.b16 %v256
      %v321 = vunpack.c.l.b16 %v257
      %v322 = vpack.c.b16 %v315, %v314
      %v323 = vpack.c.b16 %v317, %v316
      %v324 = vpack.c.b16 %v319, %v318
      %v325 = vpack.c.b16 %v321, %v320
      %330 = vmatprep.subr.bf16.mxu0 0
      %331 = vmatpush1.bf16.xpose.msra.mxu0 %v241
      %332 = vmatprep.subr.bf16.mxu0 0
      %333 = vmatpush1.bf16.xpose.msra.mxu0 %v240
      %334 = vmatprep.subr.bf16.mxu0 0
      %335 = vmatpush1.bf16.xpose.msra.mxu0 %v239
      %336 = vmatprep.subr.bf16.mxu0 0
      %337 = vmatpush1.bf16.xpose.msra.mxu0 %v238
      %338 = vmatprep.subr.bf16.mxu0 0
      %339 = vmatpush1.bf16.xpose.msra.mxu0 %v237
      %340 = vmatprep.subr.bf16.mxu0 0
      %341 = vmatpush1.bf16.xpose.msra.mxu0 %v236
      %342 = vmatprep.subr.bf16.mxu0 0
      %343 = vmatpush1.bf16.xpose.msra.mxu0 %v235
      %344 = vmatprep.subr.bf16.mxu0 0
      %345 = vmatpush1.bf16.xpose.msra.mxu0 %v234
      %346 = vmatprep.subr.bf16.mxu0 0
      %347 = vmatpush2.bf16.xpose.msra.mxu0 %v249
      %348 = vmatprep.subr.bf16.mxu0 0
      %349 = vmatpush2.bf16.xpose.msra.mxu0 %v248
      %350 = vmatprep.subr.bf16.mxu0 0
      %351 = vmatpush2.bf16.xpose.msra.mxu0 %v247
      %352 = vmatprep.subr.bf16.mxu0 0
      %353 = vmatpush2.bf16.xpose.msra.mxu0 %v246
      %354 = vmatprep.subr.bf16.mxu0 0
      %355 = vmatpush2.bf16.xpose.msra.mxu0 %v245
      %356 = vmatprep.subr.bf16.mxu0 0
      %357 = vmatpush2.bf16.xpose.msra.mxu0 %v244
      %358 = vmatprep.subr.bf16.mxu0 0
      %359 = vmatpush2.bf16.xpose.msra.mxu0 %v243
      %360 = vmatprep.subr.bf16.mxu0 0
      %361 = vmatpush2.bf16.xpose.msra.mxu0 %v242
      %362 = vmatprep.mubr.bf16.mxu0 0
      %363 = vmatmul.mubr.bf16.gmra.mxu0 %v322
      %v364 = vpop.f32.mrf.mxu0
      %v365 = vadd.f32 %v269, %v364
      %v366 = vpop.f32.mrf.mxu0
      %v367 = vadd.f32 %v269, %v366
      %v368 = vpop.f32.mrf.mxu0
      %v369 = vadd.f32 %v274, %v368
      %v370 = vpop.f32.mrf.mxu0
      %v371 = vadd.f32 %v274, %v370
      %372 = vmatprep.mubr.bf16.mxu0 0
      %373 = vmatmul.mubr.bf16.gmra.mxu0 %v323
      %v374 = vpop.f32.mrf.mxu0
      %v375 = vadd.f32 %v279, %v374
      %v376 = vpop.f32.mrf.mxu0
      %v377 = vadd.f32 %v279, %v376
      %v378 = vpop.f32.mrf.mxu0
      %v379 = vadd.f32 %v284, %v378
      %v380 = vpop.f32.mrf.mxu0
      %v381 = vadd.f32 %v284, %v380
      %382 = vmatprep.mubr.bf16.mxu0 0
      %383 = vmatmul.mubr.bf16.gmra.mxu0 %v324
      %v384 = vpop.f32.mrf.mxu0
      %v385 = vadd.f32 %v289, %v384
      %v386 = vpop.f32.mrf.mxu0
      %v387 = vadd.f32 %v289, %v386
      %v388 = vpop.f32.mrf.mxu0
      %v389 = vadd.f32 %v294, %v388
      %v390 = vpop.f32.mrf.mxu0
      %v391 = vadd.f32 %v294, %v390
      %392 = vmatprep.mubr.bf16.mxu0 0
      %393 = vmatmul.mubr.bf16.gmra.mxu0 %v325
      %v394 = vpop.f32.mrf.mxu0
      %v395 = vadd.f32 %v299, %v394
      %v396 = vpop.f32.mrf.mxu0
      %v397 = vadd.f32 %v299, %v396
      %v398 = vpop.f32.mrf.mxu0
      %v399 = vadd.f32 %v304, %v398
      %v400 = vpop.f32.mrf.mxu0
      %v401 = vadd.f32 %v304, %v400
      %402 = vdwg.mxu0
      %v403 = vtanh.pop %v365
      %v404 = vtanh.pop %v367
      %v405 = vtanh.pop %v369
      %v406 = vtanh.pop %v371
      %v407 = vtanh.pop %v375
      %v408 = vtanh.pop %v377
      %v409 = vtanh.pop %v379
      %v410 = vtanh.pop %v381
      %v411 = vtanh.pop %v385
      %v412 = vtanh.pop %v387
      %v413 = vtanh.pop %v389
      %v414 = vtanh.pop %v391
      %v415 = vtanh.pop %v395
      %v416 = vtanh.pop %v397
      %v417 = vtanh.pop %v399
      %v418 = vtanh.pop %v401
      %v419 = vld [vmem:[%s1 + $0x20] sm:$0xf]
      %v420 = vld [vmem:[%s1 + $0x24] sm:$0xf]
      %v421 = vld [vmem:[%s1 + $0x28] sm:$0xf]
      %v422 = vld [vmem:[%s1 + $0x2c] sm:$0xf]
      %v423 = vpack.c.bf16 %v405, %v403
      %v424 = vpack.c.bf16 %v406, %v404
      %v425 = vpack.c.bf16 %v409, %v407
      %v426 = vpack.c.bf16 %v410, %v408
      %v427 = vpack.c.bf16 %v413, %v411
      %v428 = vpack.c.bf16 %v414, %v412
      %v429 = vpack.c.bf16 %v417, %v415
      %v430 = vpack.c.bf16 %v418, %v416
      %v431 = vld [vmem:[%s2] sm:$0xff]
      %v432 = vld [vmem:[%s2 + $0x8] sm:$0xff]
      %v433 = vld [vmem:[%s2 + $0x10] sm:$0xff]
      %v434 = vld [vmem:[%s2 + $0x18] sm:$0xff]
      %436 = vset.pattern.permute.xlu0 1
      %437 = vperm.xlu0 %436, %v431
      %v438 = vpop.permute.xlu0 %437
      %441 = vset.pattern.permute.xlu0 1
      %442 = vperm.xlu0 %441, %v432
      %v443 = vpop.permute.xlu0 %442
      %446 = vset.pattern.permute.xlu0 1
      %447 = vperm.xlu0 %446, %v433
      %v448 = vpop.permute.xlu0 %447
      %451 = vset.pattern.permute.xlu0 1
      %452 = vperm.xlu0 %451, %v434
      %v453 = vpop.permute.xlu0 %452
      %v459 = vunpack.c.l.b16 %v419
      %v460 = vunpack.c.l.b16 %v420
      %v461 = vunpack.c.l.b16 %v421
      %v462 = vunpack.c.l.b16 %v422
      %v463 = vpack.c.b16 %v460, %v459
      %v464 = vpack.c.b16 %v462, %v461
      %vm465 = vcmask 523264
      %v467 = vsel %vm465, %v463, 0
      %v470 = vsel %vm465, %v464, 0
      %472 = vmatprep.subr.bf16.mxu0 0
      %473 = vmatpush1.bf16.msra.mxu0 0
      %474 = vmatprep.subr.bf16.mxu0 0
      %475 = vmatpush1.bf16.msra.mxu0 0
      %476 = vmatprep.subr.bf16.mxu0 0
      %477 = vmatpush1.bf16.msra.mxu0 0
      %478 = vmatprep.subr.bf16.mxu0 0
      %479 = vmatpush1.bf16.msra.mxu0 0
      %480 = vmatprep.subr.bf16.mxu0 %v430
      %481 = vmatpush1.bf16.msra.mxu0 %v429
      %482 = vmatprep.subr.bf16.mxu0 %v428
      %483 = vmatpush1.bf16.msra.mxu0 %v427
      %484 = vmatprep.subr.bf16.mxu0 %v426
      %485 = vmatpush1.bf16.msra.mxu0 %v425
      %486 = vmatprep.subr.bf16.mxu0 %v424
      %487 = vmatpush1.bf16.msra.mxu0 %v423
      %488 = vmatprep.subr.bf16.mxu0 0
      %489 = vmatpush2.bf16.msra.mxu0 0
      %490 = vmatprep.subr.bf16.mxu0 0
      %491 = vmatpush2.bf16.msra.mxu0 0
      %492 = vmatprep.subr.bf16.mxu0 0
      %493 = vmatpush2.bf16.msra.mxu0 0
      %494 = vmatprep.subr.bf16.mxu0 0
      %495 = vmatpush2.bf16.msra.mxu0 0
      %496 = vmatprep.subr.bf16.mxu0 0
      %497 = vmatpush2.bf16.msra.mxu0 0
      %498 = vmatprep.subr.bf16.mxu0 0
      %499 = vmatpush2.bf16.msra.mxu0 0
      %500 = vmatprep.subr.bf16.mxu0 0
      %501 = vmatpush2.bf16.msra.mxu0 0
      %502 = vmatprep.subr.bf16.mxu0 0
      %503 = vmatpush2.bf16.msra.mxu0 0
      %504 = vmatprep.mubr.bf16.mxu0 0
      %505 = vmatmul.mubr.bf16.gmra.mxu0 %v467
      %v506 = vpop.f32.mrf.mxu0
      %v507 = vadd.f32 %v438, %v506
      %v508 = vpop.f32.mrf.mxu0
      %v509 = vadd.f32 %v438, %v508
      %v510 = vpop.f32.mrf.mxu0
      %v511 = vadd.f32 %v443, %v510
      %v512 = vpop.f32.mrf.mxu0
      %v513 = vadd.f32 %v443, %v512
      %514 = vmatprep.mubr.bf16.mxu0 0
      %515 = vmatmul.mubr.bf16.gmra.mxu0 %v470
      %v516 = vpop.f32.mrf.mxu0
      %v517 = vadd.f32 %v448, %v516
      %v518 = vpop.f32.mrf.mxu0
      %v519 = vadd.f32 %v448, %v518
      %v520 = vpop.f32.mrf.mxu0
      %v521 = vadd.f32 %v453, %v520
      %v522 = vpop.f32.mrf.mxu0
      %v523 = vadd.f32 %v453, %v522
      %524 = vdwg.mxu0
      %v525 = vtanh.pop %v507
      %v526 = vtanh.pop %v509
      %v527 = vtanh.pop %v511
      %v528 = vtanh.pop %v513
      %v529 = vtanh.pop %v517
      %v530 = vtanh.pop %v519
      %v531 = vtanh.pop %v521
      %v532 = vtanh.pop %v523
      %v533 = vld [vmem:[%s1 + $0x30] sm:$0xf]
      %v534 = vld [vmem:[%s1 + $0x34] sm:$0xf]
      %v535 = vpack.c.bf16 %v527, %v525
      %v536 = vpack.c.bf16 %v528, %v526
      %v537 = vpack.c.bf16 %v531, %v529
      %v538 = vpack.c.bf16 %v532, %v530
      %v539 = vld [vmem:[%s2] sm:$0xff]
      %v540 = vld [vmem:[%s2 + $0x8] sm:$0xff]
      %542 = vset.pattern.permute.xlu0 2
      %543 = vperm.xlu0 %542, %v539
      %v544 = vpop.permute.xlu0 %543
      %547 = vset.pattern.permute.xlu0 2
      %548 = vperm.xlu0 %547, %v540
      %v549 = vpop.permute.xlu0 %548
      %v553 = vunpack.c.l.b16 %v533
      %v554 = vunpack.c.l.b16 %v534
      %v555 = vpack.c.b16 %v554, %v553
      %vm556 = vcmask 261120
      %v558 = vsel %vm556, %v555, 0
      %560 = vmatprep.subr.bf16.mxu0 0
      %561 = vmatpush1.bf16.msra.mxu0 0
      %562 = vmatprep.subr.bf16.mxu0 0
      %563 = vmatpush1.bf16.msra.mxu0 0
      %564 = vmatprep.subr.bf16.mxu0 0
      %565 = vmatpush1.bf16.msra.mxu0 0
      %566 = vmatprep.subr.bf16.mxu0 0
      %567 = vmatpush1.bf16.msra.mxu0 0
      %568 = vmatprep.subr.bf16.mxu0 0
      %569 = vmatpush1.bf16.msra.mxu0 0
      %570 = vmatprep.subr.bf16.mxu0 0
      %571 = vmatpush1.bf16.msra.mxu0 0
      %572 = vmatprep.subr.bf16.mxu0 %v538
      %573 = vmatpush1.bf16.msra.mxu0 %v537
      %574 = vmatprep.subr.bf16.mxu0 %v536
      %575 = vmatpush1.bf16.msra.mxu0 %v535
      %576 = vmatprep.subr.bf16.mxu0 0
      %577 = vmatpush2.bf16.msra.mxu0 0
      %578 = vmatprep.subr.bf16.mxu0 0
      %579 = vmatpush2.bf16.msra.mxu0 0
      %580 = vmatprep.subr.bf16.mxu0 0
      %581 = vmatpush2.bf16.msra.mxu0 0
      %582 = vmatprep.subr.bf16.mxu0 0
      %583 = vmatpush2.bf16.msra.mxu0 0
      %584 = vmatprep.subr.bf16.mxu0 0
      %585 = vmatpush2.bf16.msra.mxu0 0
      %586 = vmatprep.subr.bf16.mxu0 0
      %587 = vmatpush2.bf16.msra.mxu0 0
      %588 = vmatprep.subr.bf16.mxu0 0
      %589 = vmatpush2.bf16.msra.mxu0 0
      %590 = vmatprep.subr.bf16.mxu0 0
      %591 = vmatpush2.bf16.msra.mxu0 0
      %592 = vmatprep.mubr.bf16.mxu0 0
      %593 = vmatmul.mubr.bf16.gmra.mxu0 %v558
      %v594 = vpop.f32.mrf.mxu0
      %v595 = vadd.f32 %v544, %v594
      %v596 = vpop.f32.mrf.mxu0
      %v597 = vadd.f32 %v544, %v596
      %v598 = vpop.f32.mrf.mxu0
      %v599 = vadd.f32 %v549, %v598
      %v600 = vpop.f32.mrf.mxu0
      %v601 = vadd.f32 %v549, %v600
      %602 = vdwg.mxu0
      %v603 = vtanh.pop %v595
      %v604 = vtanh.pop %v597
      %v605 = vtanh.pop %v599
      %v606 = vtanh.pop %v601
      %v607 = vld [vmem:[%s1 + $0x38] sm:$0xf]
      %v608 = vpack.c.bf16 %v605, %v603
      %v609 = vpack.c.bf16 %v606, %v604
      %v610 = vld [vmem:[%s2] sm:$0xff]
      %612 = vset.pattern.permute.xlu0 3
      %613 = vperm.xlu0 %612, %v610
      %v614 = vpop.permute.xlu0 %613
      %vm616 = vcmask 130048
      %v618 = vsel %vm616, %v607, 0
      %620 = vmatprep.subr.bf16.mxu0 0
      %621 = vmatpush1.bf16.msra.mxu0 0
      %622 = vmatprep.subr.bf16.mxu0 0
      %623 = vmatpush1.bf16.msra.mxu0 0
      %624 = vmatprep.subr.bf16.mxu0 0
      %625 = vmatpush1.bf16.msra.mxu0 0
      %626 = vmatprep.subr.bf16.mxu0 0
      %627 = vmatpush1.bf16.msra.mxu0 0
      %628 = vmatprep.subr.bf16.mxu0 0
      %629 = vmatpush1.bf16.msra.mxu0 0
      %630 = vmatprep.subr.bf16.mxu0 0
      %631 = vmatpush1.bf16.msra.mxu0 0
      %632 = vmatprep.subr.bf16.mxu0 0
      %633 = vmatpush1.bf16.msra.mxu0 0
      %634 = vmatprep.subr.bf16.mxu0 %v609
      %635 = vmatpush1.bf16.msra.mxu0 %v608
      %636 = vmatprep.subr.bf16.mxu0 0
      %637 = vmatpush2.bf16.msra.mxu0 0
      %638 = vmatprep.subr.bf16.mxu0 0
      %639 = vmatpush2.bf16.msra.mxu0 0
      %640 = vmatprep.subr.bf16.mxu0 0
      %641 = vmatpush2.bf16.msra.mxu0 0
      %642 = vmatprep.subr.bf16.mxu0 0
      %643 = vmatpush2.bf16.msra.mxu0 0
      %644 = vmatprep.subr.bf16.mxu0 0
      %645 = vmatpush2.bf16.msra.mxu0 0
      %646 = vmatprep.subr.bf16.mxu0 0
      %647 = vmatpush2.bf16.msra.mxu0 0
      %648 = vmatprep.subr.bf16.mxu0 0
      %649 = vmatpush2.bf16.msra.mxu0 0
      %650 = vmatprep.subr.bf16.mxu0 0
      %651 = vmatpush2.bf16.msra.mxu0 0
      %652 = vmatprep.mubr.bf16.mxu0 0
      %653 = vmatmul.mubr.bf16.gmra.mxu0 %v618
      %v654 = vpop.f32.mrf.mxu0
      %v655 = vadd.f32 %v614, %v654
      %v656 = vpop.f32.mrf.mxu0
      %v657 = vadd.f32 %v614, %v656
      %v658 = vpop.f32.mrf.mxu0
      %v659 = vpop.f32.mrf.mxu0
      %660 = vdwg.mxu0
      %v661 = vtanh.pop %v655
      %v662 = vtanh.pop %v657
      %v663 = vld [vmem:[%s1 + $0x40] sm:$0xf]
      %v664 = vpack.c.bf16 %v661, %v661
      %v665 = vpack.c.bf16 %v662, %v662
      %666 = vset.pattern.permute.xlu0 4
      %667 = vperm.xlu0 %666, %v610
      %v668 = vpop.permute.xlu0 %667
      %vm670 = vcmask 64512
      %v672 = vsel %vm670, %v663, 0
      %vm674 = vcmask 1043456
      %v676 = vsel %vm674, %v664, 0
      %v679 = vsel %vm674, %v665, 0
      %681 = vmatprep.subr.bf16.mxu0 0
      %682 = vmatpush1.bf16.msra.mxu0 0
      %683 = vmatprep.subr.bf16.mxu0 0
      %684 = vmatpush1.bf16.msra.mxu0 0
      %685 = vmatprep.subr.bf16.mxu0 0
      %686 = vmatpush1.bf16.msra.mxu0 0
      %687 = vmatprep.subr.bf16.mxu0 0
      %688 = vmatpush1.bf16.msra.mxu0 0
      %689 = vmatprep.subr.bf16.mxu0 0
      %690 = vmatpush1.bf16.msra.mxu0 0
      %691 = vmatprep.subr.bf16.mxu0 0
      %692 = vmatpush1.bf16.msra.mxu0 0
      %693 = vmatprep.subr.bf16.mxu0 0
      %694 = vmatpush1.bf16.msra.mxu0 0
      %695 = vmatprep.subr.bf16.mxu0 %v679
      %696 = vmatpush1.bf16.msra.mxu0 %v676
      %697 = vmatprep.subr.bf16.mxu0 0
      %698 = vmatpush2.bf16.msra.mxu0 0
      %699 = vmatprep.subr.bf16.mxu0 0
      %700 = vmatpush2.bf16.msra.mxu0 0
      %701 = vmatprep.subr.bf16.mxu0 0
      %702 = vmatpush2.bf16.msra.mxu0 0
      %703 = vmatprep.subr.bf16.mxu0 0
      %704 = vmatpush2.bf16.msra.mxu0 0
      %705 = vmatprep.subr.bf16.mxu0 0
      %706 = vmatpush2.bf16.msra.mxu0 0
      %707 = vmatprep.subr.bf16.mxu0 0
      %708 = vmatpush2.bf16.msra.mxu0 0
      %709 = vmatprep.subr.bf16.mxu0 0
      %710 = vmatpush2.bf16.msra.mxu0 0
      %711 = vmatprep.subr.bf16.mxu0 0
      %712 = vmatpush2.bf16.msra.mxu0 0
      %713 = vmatprep.mubr.bf16.mxu0 0
      %714 = vmatmul.mubr.bf16.gmra.mxu0 %v672
      %v715 = vpop.f32.mrf.mxu0
      %v716 = vadd.f32 %v668, %v715
      %v717 = vpop.f32.mrf.mxu0
      %v718 = vadd.f32 %v668, %v717
      %v719 = vpop.f32.mrf.mxu0
      %v720 = vpop.f32.mrf.mxu0
      %721 = vdwg.mxu0
      %v722 = vtanh.pop %v716
      %v723 = vtanh.pop %v718
      %v724 = vld [vmem:[%s1 + $0x48] sm:$0xf]
      %v725 = vld [vmem:[%s1 + $0x4c] sm:$0xf]
      %v726 = vpack.c.bf16 %v722, %v722
      %v727 = vpack.c.bf16 %v723, %v723
      %728 = vset.pattern.permute.xlu0 5
      %729 = vperm.xlu0 %728, %v539
      %v730 = vpop.permute.xlu0 %729
      %732 = vset.pattern.permute.xlu0 5
      %733 = vperm.xlu0 %732, %v540
      %v734 = vpop.permute.xlu0 %733
      %v738 = vunpack.c.l.b16 %v724
      %v739 = vunpack.c.l.b16 %v725
      %v740 = vpack.c.b16 %v739, %v738
      %v742 = vsel %vm670, %v740, 0
      %v745 = vsel %vm674, %v726, 0
      %v748 = vsel %vm674, %v727, 0
      %750 = vmatprep.subr.bf16.mxu0 0
      %751 = vmatpush1.bf16.msra.mxu0 0
      %752 = vmatprep.subr.bf16.mxu0 0
      %753 = vmatpush1.bf16.msra.mxu0 0
      %754 = vmatprep.subr.bf16.mxu0 0
      %755 = vmatpush1.bf16.msra.mxu0 0
      %756 = vmatprep.subr.bf16.mxu0 0
      %757 = vmatpush1.bf16.msra.mxu0 0
      %758 = vmatprep.subr.bf16.mxu0 0
      %759 = vmatpush1.bf16.msra.mxu0 0
      %760 = vmatprep.subr.bf16.mxu0 0
      %761 = vmatpush1.bf16.msra.mxu0 0
      %762 = vmatprep.subr.bf16.mxu0 0
      %763 = vmatpush1.bf16.msra.mxu0 0
      %764 = vmatprep.subr.bf16.mxu0 %v748
      %765 = vmatpush1.bf16.msra.mxu0 %v745
      %766 = vmatprep.subr.bf16.mxu0 0
      %767 = vmatpush2.bf16.msra.mxu0 0
      %768 = vmatprep.subr.bf16.mxu0 0
      %769 = vmatpush2.bf16.msra.mxu0 0
      %770 = vmatprep.subr.bf16.mxu0 0
      %771 = vmatpush2.bf16.msra.mxu0 0
      %772 = vmatprep.subr.bf16.mxu0 0
      %773 = vmatpush2.bf16.msra.mxu0 0
      %774 = vmatprep.subr.bf16.mxu0 0
      %775 = vmatpush2.bf16.msra.mxu0 0
      %776 = vmatprep.subr.bf16.mxu0 0
      %777 = vmatpush2.bf16.msra.mxu0 0
      %778 = vmatprep.subr.bf16.mxu0 0
      %779 = vmatpush2.bf16.msra.mxu0 0
      %780 = vmatprep.subr.bf16.mxu0 0
      %781 = vmatpush2.bf16.msra.mxu0 0
      %782 = vmatprep.mubr.bf16.mxu0 0
      %783 = vmatmul.mubr.bf16.gmra.mxu0 %v742
      %v784 = vpop.f32.mrf.mxu0
      %v785 = vadd.f32 %v730, %v784
      %v786 = vpop.f32.mrf.mxu0
      %v787 = vadd.f32 %v730, %v786
      %v788 = vpop.f32.mrf.mxu0
      %v789 = vadd.f32 %v734, %v788
      %v790 = vpop.f32.mrf.mxu0
      %v791 = vadd.f32 %v734, %v790
      %792 = vdwg.mxu0
      %v793 = vtanh.pop %v785
      %v794 = vtanh.pop %v787
      %v795 = vtanh.pop %v789
      %v796 = vtanh.pop %v791
      %v797 = vld [vmem:[%s1 + $0x50] sm:$0xf]
      %v798 = vld [vmem:[%s1 + $0x54] sm:$0xf]
      %v799 = vld [vmem:[%s1 + $0x58] sm:$0xf]
      %v800 = vld [vmem:[%s1 + $0x5c] sm:$0xf]
      %v801 = vpack.c.bf16 %v795, %v793
      %v802 = vpack.c.bf16 %v796, %v794
      %803 = vset.pattern.permute.xlu0 6
      %804 = vperm.xlu0 %803, %v431
      %v805 = vpop.permute.xlu0 %804
      %807 = vset.pattern.permute.xlu0 6
      %808 = vperm.xlu0 %807, %v432
      %v809 = vpop.permute.xlu0 %808
      %811 = vset.pattern.permute.xlu0 6
      %812 = vperm.xlu0 %811, %v433
      %v813 = vpop.permute.xlu0 %812
      %815 = vset.pattern.permute.xlu0 6
      %816 = vperm.xlu0 %815, %v434
      %v817 = vpop.permute.xlu0 %816
      %v823 = vunpack.c.l.b16 %v797
      %v824 = vunpack.c.l.b16 %v798
      %v825 = vunpack.c.l.b16 %v799
      %v826 = vunpack.c.l.b16 %v800
      %v827 = vpack.c.b16 %v824, %v823
      %v828 = vpack.c.b16 %v826, %v825
      %v830 = vsel %vm616, %v827, 0
      %v833 = vsel %vm616, %v828, 0
      %835 = vmatprep.subr.bf16.mxu0 0
      %836 = vmatpush1.bf16.msra.mxu0 0
      %837 = vmatprep.subr.bf16.mxu0 0
      %838 = vmatpush1.bf16.msra.mxu0 0
      %839 = vmatprep.subr.bf16.mxu0 0
      %840 = vmatpush1.bf16.msra.mxu0 0
      %841 = vmatprep.subr.bf16.mxu0 0
      %842 = vmatpush1.bf16.msra.mxu0 0
      %843 = vmatprep.subr.bf16.mxu0 0
      %844 = vmatpush1.bf16.msra.mxu0 0
      %845 = vmatprep.subr.bf16.mxu0 0
      %846 = vmatpush1.bf16.msra.mxu0 0
      %847 = vmatprep.subr.bf16.mxu0 0
      %848 = vmatpush1.bf16.msra.mxu0 0
      %849 = vmatprep.subr.bf16.mxu0 %v802
      %850 = vmatpush1.bf16.msra.mxu0 %v801
      %851 = vmatprep.subr.bf16.mxu0 0
      %852 = vmatpush2.bf16.msra.mxu0 0
      %853 = vmatprep.subr.bf16.mxu0 0
      %854 = vmatpush2.bf16.msra.mxu0 0
      %855 = vmatprep.subr.bf16.mxu0 0
      %856 = vmatpush2.bf16.msra.mxu0 0
      %857 = vmatprep.subr.bf16.mxu0 0
      %858 = vmatpush2.bf16.msra.mxu0 0
      %859 = vmatprep.subr.bf16.mxu0 0
      %860 = vmatpush2.bf16.msra.mxu0 0
      %861 = vmatprep.subr.bf16.mxu0 0
      %862 = vmatpush2.bf16.msra.mxu0 0
      %863 = vmatprep.subr.bf16.mxu0 0
      %864 = vmatpush2.bf16.msra.mxu0 0
      %865 = vmatprep.subr.bf16.mxu0 0
      %866 = vmatpush2.bf16.msra.mxu0 0
      %867 = vmatprep.mubr.bf16.mxu0 0
      %868 = vmatmul.mubr.bf16.gmra.mxu0 %v830
      %v869 = vpop.f32.mrf.mxu0
      %v870 = vadd.f32 %v805, %v869
      %v871 = vpop.f32.mrf.mxu0
      %v872 = vadd.f32 %v805, %v871
      %v873 = vpop.f32.mrf.mxu0
      %v874 = vadd.f32 %v809, %v873
      %v875 = vpop.f32.mrf.mxu0
      %v876 = vadd.f32 %v809, %v875
      %877 = vmatprep.mubr.bf16.mxu0 0
      %878 = vmatmul.mubr.bf16.gmra.mxu0 %v833
      %v879 = vpop.f32.mrf.mxu0
      %v880 = vadd.f32 %v813, %v879
      %v881 = vpop.f32.mrf.mxu0
      %v882 = vadd.f32 %v813, %v881
      %v883 = vpop.f32.mrf.mxu0
      %v884 = vadd.f32 %v817, %v883
      %v885 = vpop.f32.mrf.mxu0
      %v886 = vadd.f32 %v817, %v885
      %887 = vdwg.mxu0
      %v888 = vtanh.pop %v870
      %v889 = vtanh.pop %v872
      %v890 = vtanh.pop %v874
      %v891 = vtanh.pop %v876
      %v892 = vtanh.pop %v880
      %v893 = vtanh.pop %v882
      %v894 = vtanh.pop %v884
      %v895 = vtanh.pop %v886
      %v896 = vld [vmem:[%s1 + $0x60] sm:$0xf]
      %v897 = vld [vmem:[%s1 + $0x64] sm:$0xf]
      %v898 = vld [vmem:[%s1 + $0x68] sm:$0xf]
      %v899 = vld [vmem:[%s1 + $0x6c] sm:$0xf]
      %v900 = vld [vmem:[%s1 + $0x70] sm:$0xf]
      %v901 = vld [vmem:[%s1 + $0x74] sm:$0xf]
      %v902 = vld [vmem:[%s1 + $0x78] sm:$0xf]
      %v903 = vld [vmem:[%s1 + $0x7c] sm:$0xf]
      %v904 = vpack.c.bf16 %v890, %v888
      %v905 = vpack.c.bf16 %v891, %v889
      %v906 = vpack.c.bf16 %v894, %v892
      %v907 = vpack.c.bf16 %v895, %v893
      %908 = vset.pattern.permute.xlu0 7
      %909 = vperm.xlu0 %908, %v258
      %v910 = vpop.permute.xlu0 %909
      %912 = vset.pattern.permute.xlu0 7
      %913 = vperm.xlu0 %912, %v259
      %v914 = vpop.permute.xlu0 %913
      %916 = vset.pattern.permute.xlu0 7
      %917 = vperm.xlu0 %916, %v260
      %v918 = vpop.permute.xlu0 %917
      %920 = vset.pattern.permute.xlu0 7
      %921 = vperm.xlu0 %920, %v261
      %v922 = vpop.permute.xlu0 %921
      %924 = vset.pattern.permute.xlu0 7
      %925 = vperm.xlu0 %924, %v262
      %v926 = vpop.permute.xlu0 %925
      %928 = vset.pattern.permute.xlu0 7
      %929 = vperm.xlu0 %928, %v263
      %v930 = vpop.permute.xlu0 %929
      %932 = vset.pattern.permute.xlu0 7
      %933 = vperm.xlu0 %932, %v264
      %v934 = vpop.permute.xlu0 %933
      %936 = vset.pattern.permute.xlu0 7
      %937 = vperm.xlu0 %936, %v265
      %v938 = vpop.permute.xlu0 %937
      %v948 = vunpack.c.l.b16 %v896
      %v949 = vunpack.c.l.b16 %v897
      %v950 = vunpack.c.l.b16 %v898
      %v951 = vunpack.c.l.b16 %v899
      %v952 = vunpack.c.l.b16 %v900
      %v953 = vunpack.c.l.b16 %v901
      %v954 = vunpack.c.l.b16 %v902
      %v955 = vunpack.c.l.b16 %v903
      %v956 = vpack.c.b16 %v949, %v948
      %v957 = vpack.c.b16 %v951, %v950
      %v958 = vpack.c.b16 %v953, %v952
      %v959 = vpack.c.b16 %v955, %v954
      %v961 = vsel %vm556, %v956, 0
      %v964 = vsel %vm556, %v957, 0
      %v967 = vsel %vm556, %v958, 0
      %v970 = vsel %vm556, %v959, 0
      %972 = vmatprep.subr.bf16.mxu0 0
      %973 = vmatpush1.bf16.msra.mxu0 0
      %974 = vmatprep.subr.bf16.mxu0 0
      %975 = vmatpush1.bf16.msra.mxu0 0
      %976 = vmatprep.subr.bf16.mxu0 0
      %977 = vmatpush1.bf16.msra.mxu0 0
      %978 = vmatprep.subr.bf16.mxu0 0
      %979 = vmatpush1.bf16.msra.mxu0 0
      %980 = vmatprep.subr.bf16.mxu0 0
      %981 = vmatpush1.bf16.msra.mxu0 0
      %982 = vmatprep.subr.bf16.mxu0 0
      %983 = vmatpush1.bf16.msra.mxu0 0
      %984 = vmatprep.subr.bf16.mxu0 %v907
      %985 = vmatpush1.bf16.msra.mxu0 %v906
      %986 = vmatprep.subr.bf16.mxu0 %v905
      %987 = vmatpush1.bf16.msra.mxu0 %v904
      %988 = vmatprep.subr.bf16.mxu0 0
      %989 = vmatpush2.bf16.msra.mxu0 0
      %990 = vmatprep.subr.bf16.mxu0 0
      %991 = vmatpush2.bf16.msra.mxu0 0
      %992 = vmatprep.subr.bf16.mxu0 0
      %993 = vmatpush2.bf16.msra.mxu0 0
      %994 = vmatprep.subr.bf16.mxu0 0
      %995 = vmatpush2.bf16.msra.mxu0 0
      %996 = vmatprep.subr.bf16.mxu0 0
      %997 = vmatpush2.bf16.msra.mxu0 0
      %998 = vmatprep.subr.bf16.mxu0 0
      %999 = vmatpush2.bf16.msra.mxu0 0
      %1000 = vmatprep.subr.bf16.mxu0 0
      %1001 = vmatpush2.bf16.msra.mxu0 0
      %1002 = vmatprep.subr.bf16.mxu0 0
      %1003 = vmatpush2.bf16.msra.mxu0 0
      %1004 = vmatprep.mubr.bf16.mxu0 0
      %1005 = vmatmul.mubr.bf16.gmra.mxu0 %v961
      %v1006 = vpop.f32.mrf.mxu0
      %v1007 = vadd.f32 %v910, %v1006
      %v1008 = vpop.f32.mrf.mxu0
      %v1009 = vadd.f32 %v910, %v1008
      %v1010 = vpop.f32.mrf.mxu0
      %v1011 = vadd.f32 %v914, %v1010
      %v1012 = vpop.f32.mrf.mxu0
      %v1013 = vadd.f32 %v914, %v1012
      %1014 = vmatprep.mubr.bf16.mxu0 0
      %1015 = vmatmul.mubr.bf16.gmra.mxu0 %v964
      %v1016 = vpop.f32.mrf.mxu0
      %v1017 = vadd.f32 %v918, %v1016
      %v1018 = vpop.f32.mrf.mxu0
      %v1019 = vadd.f32 %v918, %v1018
      %v1020 = vpop.f32.mrf.mxu0
      %v1021 = vadd.f32 %v922, %v1020
      %v1022 = vpop.f32.mrf.mxu0
      %v1023 = vadd.f32 %v922, %v1022
      %1024 = vmatprep.mubr.bf16.mxu0 0
      %1025 = vmatmul.mubr.bf16.gmra.mxu0 %v967
      %v1026 = vpop.f32.mrf.mxu0
      %v1027 = vadd.f32 %v926, %v1026
      %v1028 = vpop.f32.mrf.mxu0
      %v1029 = vadd.f32 %v926, %v1028
      %v1030 = vpop.f32.mrf.mxu0
      %v1031 = vadd.f32 %v930, %v1030
      %v1032 = vpop.f32.mrf.mxu0
      %v1033 = vadd.f32 %v930, %v1032
      %1034 = vmatprep.mubr.bf16.mxu0 0
      %1035 = vmatmul.mubr.bf16.gmra.mxu0 %v970
      %v1036 = vpop.f32.mrf.mxu0
      %v1037 = vadd.f32 %v934, %v1036
      %v1038 = vpop.f32.mrf.mxu0
      %v1039 = vadd.f32 %v934, %v1038
      %v1040 = vpop.f32.mrf.mxu0
      %v1041 = vadd.f32 %v938, %v1040
      %v1042 = vpop.f32.mrf.mxu0
      %v1043 = vadd.f32 %v938, %v1042
      %1044 = vdwg.mxu0
      %v1045 = vtanh.pop %v1007
      %v1046 = vtanh.pop %v1009
      %v1047 = vtanh.pop %v1011
      %v1048 = vtanh.pop %v1013
      %v1049 = vtanh.pop %v1017
      %v1050 = vtanh.pop %v1019
      %v1051 = vtanh.pop %v1021
      %v1052 = vtanh.pop %v1023
      %v1053 = vtanh.pop %v1027
      %v1054 = vtanh.pop %v1029
      %v1055 = vtanh.pop %v1031
      %v1056 = vtanh.pop %v1033
      %v1057 = vtanh.pop %v1037
      %v1058 = vtanh.pop %v1039
      %v1059 = vtanh.pop %v1041
      %v1060 = vtanh.pop %v1043
      %v1061 = vld [vmem:[%s1 + $0x80] sm:$0xf]
      %v1062 = vld [vmem:[%s1 + $0x84] sm:$0xf]
      %v1063 = vld [vmem:[%s1 + $0x88] sm:$0xf]
      %v1064 = vld [vmem:[%s1 + $0x8c] sm:$0xf]
      %v1065 = vld [vmem:[%s1 + $0x90] sm:$0xf]
      %v1066 = vld [vmem:[%s1 + $0x94] sm:$0xf]
      %v1067 = vld [vmem:[%s1 + $0x98] sm:$0xf]
      %v1068 = vld [vmem:[%s1 + $0x9c] sm:$0xf]
      %v1069 = vpack.c.bf16 %v1047, %v1045
      %v1070 = vpack.c.bf16 %v1048, %v1046
      %v1071 = vpack.c.bf16 %v1051, %v1049
      %v1072 = vpack.c.bf16 %v1052, %v1050
      %v1073 = vpack.c.bf16 %v1055, %v1053
      %v1074 = vpack.c.bf16 %v1056, %v1054
      %v1075 = vpack.c.bf16 %v1059, %v1057
      %v1076 = vpack.c.bf16 %v1060, %v1058
      %v1077 = vld [vmem:[%s3] sm:$0x1]
      %v1079 = vlaneseq
      %v1080 = vshrl.u32 %v1079, 7
      %v1081 = vsub.s32 0, %v1080
      %v1082 = vrot.slane %v1077, %v1081
      %1084 = vxpose.xlu0.c.b16.start [1/8] %v1069, 128
      %1085 = vxpose.xlu0.c.b16.cont [2/8] %v1071, 128
      %1086 = vxpose.xlu0.c.b16.cont [3/8] %v1073, 128
      %1087 = vxpose.xlu0.c.b16.cont [4/8] %v1075, 128
      %1088 = vxpose.xlu0.c.b16.cont [5/8] 0, 128
      %1089 = vxpose.xlu0.c.b16.cont [6/8] 0, 128
      %1090 = vxpose.xlu0.c.b16.cont [7/8] 0, 128
      %1091 = vxpose.xlu0.c.b16.end [8/8] 0, 128
      %v1092 = vpop.trf.xlu0
      %v1093 = vpop.trf.xlu0
      %v1094 = vpop.trf.xlu0
      %v1095 = vpop.trf.xlu0
      %v1096 = vpop.trf.xlu0
      %v1097 = vpop.trf.xlu0
      %v1098 = vpop.trf.xlu0
      %v1099 = vpop.trf.xlu0
      %1100 = vxpose.xlu0.c.b16.start [1/8] %v1070, 128
      %1101 = vxpose.xlu0.c.b16.cont [2/8] %v1072, 128
      %1102 = vxpose.xlu0.c.b16.cont [3/8] %v1074, 128
      %1103 = vxpose.xlu0.c.b16.cont [4/8] %v1076, 128
      %1104 = vxpose.xlu0.c.b16.cont [5/8] 0, 128
      %1105 = vxpose.xlu0.c.b16.cont [6/8] 0, 128
      %1106 = vxpose.xlu0.c.b16.cont [7/8] 0, 128
      %1107 = vxpose.xlu0.c.b16.end [8/8] 0, 128
      %v1108 = vpop.trf.xlu0
      %v1109 = vpop.trf.xlu0
      %v1110 = vpop.trf.xlu0
      %v1111 = vpop.trf.xlu0
      %v1112 = vpop.trf.xlu0
      %v1113 = vpop.trf.xlu0
      %v1114 = vpop.trf.xlu0
      %v1115 = vpop.trf.xlu0
      %v1124 = vunpack.c.l.b16 %v1061
      %v1125 = vunpack.c.l.b16 %v1062
      %v1126 = vunpack.c.l.b16 %v1063
      %v1127 = vunpack.c.l.b16 %v1064
      %v1128 = vunpack.c.l.b16 %v1065
      %v1129 = vunpack.c.l.b16 %v1066
      %v1130 = vunpack.c.l.b16 %v1067
      %v1131 = vunpack.c.l.b16 %v1068
      %v1132 = vpack.c.b16 %v1125, %v1124
      %v1133 = vpack.c.b16 %v1127, %v1126
      %v1134 = vpack.c.b16 %v1129, %v1128
      %v1135 = vpack.c.b16 %v1131, %v1130
      %v1141 = vsel %vm465, %v1092, 0
      %v1144 = vsel %vm465, %v1093, 0
      %v1147 = vsel %vm465, %v1094, 0
      %v1150 = vsel %vm465, %v1095, 0
      %v1153 = vsel %vm465, %v1096, 0
      %v1156 = vsel %vm465, %v1097, 0
      %v1159 = vsel %vm465, %v1098, 0
      %v1162 = vsel %vm465, %v1099, 0
      %v1165 = vsel %vm465, %v1108, 0
      %v1168 = vsel %vm465, %v1109, 0
      %v1171 = vsel %vm465, %v1110, 0
      %v1174 = vsel %vm465, %v1111, 0
      %v1177 = vsel %vm465, %v1112, 0
      %v1180 = vsel %vm465, %v1113, 0
      %v1183 = vsel %vm465, %v1114, 0
      %v1186 = vsel %vm465, %v1115, 0
      %1188 = vmatprep.subr.bf16.mxu0 0
      %1189 = vmatpush1.bf16.msra.mxu0 0
      %1190 = vmatprep.subr.bf16.mxu0 0
      %1191 = vmatpush1.bf16.msra.mxu0 0
      %1192 = vmatprep.subr.bf16.mxu0 0
      %1193 = vmatpush1.bf16.msra.mxu0 0
      %1194 = vmatprep.subr.bf16.mxu0 0
      %1195 = vmatpush1.bf16.msra.mxu0 0
      %1196 = vmatprep.subr.bf16.mxu0 0
      %1197 = vmatpush1.bf16.msra.mxu0 %v1135
      %1198 = vmatprep.subr.bf16.mxu0 0
      %1199 = vmatpush1.bf16.msra.mxu0 %v1134
      %1200 = vmatprep.subr.bf16.mxu0 0
      %1201 = vmatpush1.bf16.msra.mxu0 %v1133
      %1202 = vmatprep.subr.bf16.mxu0 0
      %1203 = vmatpush1.bf16.msra.mxu0 %v1132
      %1204 = vmatprep.subr.bf16.mxu0 0
      %1205 = vmatpush2.bf16.msra.mxu0 0
      %1206 = vmatprep.subr.bf16.mxu0 0
      %1207 = vmatpush2.bf16.msra.mxu0 0
      %1208 = vmatprep.subr.bf16.mxu0 0
      %1209 = vmatpush2.bf16.msra.mxu0 0
      %1210 = vmatprep.subr.bf16.mxu0 0
      %1211 = vmatpush2.bf16.msra.mxu0 0
      %1212 = vmatprep.subr.bf16.mxu0 0
      %1213 = vmatpush2.bf16.msra.mxu0 0
      %1214 = vmatprep.subr.bf16.mxu0 0
      %1215 = vmatpush2.bf16.msra.mxu0 0
      %1216 = vmatprep.subr.bf16.mxu0 0
      %1217 = vmatpush2.bf16.msra.mxu0 0
      %1218 = vmatprep.subr.bf16.mxu0 0
      %1219 = vmatpush2.bf16.msra.mxu0 0
      %1220 = vmatprep.mubr.bf16.mxu0 0
      %1221 = vmatmul.mubr.bf16.gmra.mxu0 %v1141
      %v1222 = vpop.f32.mrf.mxu0
      %v1223 = vadd.f32 %v1082, %v1222
      %v1224 = vpop.f32.mrf.mxu0
      %v1225 = vpop.f32.mrf.mxu0
      %v1226 = vadd.f32 %v1082, %v1225
      %v1227 = vpop.f32.mrf.mxu0
      %1228 = vmatprep.mubr.bf16.mxu0 0
      %1229 = vmatmul.mubr.bf16.gmra.mxu0 %v1144
      %v1230 = vpop.f32.mrf.mxu0
      %v1231 = vadd.f32 %v1082, %v1230
      %v1232 = vpop.f32.mrf.mxu0
      %v1233 = vpop.f32.mrf.mxu0
      %v1234 = vadd.f32 %v1082, %v1233
      %v1235 = vpop.f32.mrf.mxu0
      %1236 = vmatprep.mubr.bf16.mxu0 0
      %1237 = vmatmul.mubr.bf16.gmra.mxu0 %v1147
      %v1238 = vpop.f32.mrf.mxu0
      %v1239 = vadd.f32 %v1082, %v1238
      %v1240 = vpop.f32.mrf.mxu0
      %v1241 = vpop.f32.mrf.mxu0
      %v1242 = vadd.f32 %v1082, %v1241
      %v1243 = vpop.f32.mrf.mxu0
      %1244 = vmatprep.mubr.bf16.mxu0 0
      %1245 = vmatmul.mubr.bf16.gmra.mxu0 %v1150
      %v1246 = vpop.f32.mrf.mxu0
      %v1247 = vadd.f32 %v1082, %v1246
      %v1248 = vpop.f32.mrf.mxu0
      %v1249 = vpop.f32.mrf.mxu0
      %v1250 = vadd.f32 %v1082, %v1249
      %v1251 = vpop.f32.mrf.mxu0
      %1252 = vmatprep.mubr.bf16.mxu0 0
      %1253 = vmatmul.mubr.bf16.gmra.mxu0 %v1153
      %v1254 = vpop.f32.mrf.mxu0
      %v1255 = vadd.f32 %v1082, %v1254
      %v1256 = vpop.f32.mrf.mxu0
      %v1257 = vpop.f32.mrf.mxu0
      %v1258 = vadd.f32 %v1082, %v1257
      %v1259 = vpop.f32.mrf.mxu0
      %1260 = vmatprep.mubr.bf16.mxu0 0
      %1261 = vmatmul.mubr.bf16.gmra.mxu0 %v1156
      %v1262 = vpop.f32.mrf.mxu0
      %v1263 = vadd.f32 %v1082, %v1262
      %v1264 = vpop.f32.mrf.mxu0
      %v1265 = vpop.f32.mrf.mxu0
      %v1266 = vadd.f32 %v1082, %v1265
      %v1267 = vpop.f32.mrf.mxu0
      %1268 = vmatprep.mubr.bf16.mxu0 0
      %1269 = vmatmul.mubr.bf16.gmra.mxu0 %v1159
      %v1270 = vpop.f32.mrf.mxu0
      %v1271 = vadd.f32 %v1082, %v1270
      %v1272 = vpop.f32.mrf.mxu0
      %v1273 = vpop.f32.mrf.mxu0
      %v1274 = vadd.f32 %v1082, %v1273
      %v1275 = vpop.f32.mrf.mxu0
      %1276 = vmatprep.mubr.bf16.mxu0 0
      %1277 = vmatmul.mubr.bf16.gmra.mxu0 %v1162
      %v1278 = vpop.f32.mrf.mxu0
      %v1279 = vadd.f32 %v1082, %v1278
      %v1280 = vpop.f32.mrf.mxu0
      %v1281 = vpop.f32.mrf.mxu0
      %v1282 = vadd.f32 %v1082, %v1281
      %v1283 = vpop.f32.mrf.mxu0
      %1284 = vmatprep.mubr.bf16.mxu0 0
      %1285 = vmatmul.mubr.bf16.gmra.mxu0 %v1165
      %v1286 = vpop.f32.mrf.mxu0
      %v1287 = vadd.f32 %v1082, %v1286
      %v1288 = vpop.f32.mrf.mxu0
      %v1289 = vpop.f32.mrf.mxu0
      %v1290 = vadd.f32 %v1082, %v1289
      %v1291 = vpop.f32.mrf.mxu0
      %1292 = vmatprep.mubr.bf16.mxu0 0
      %1293 = vmatmul.mubr.bf16.gmra.mxu0 %v1168
      %v1294 = vpop.f32.mrf.mxu0
      %v1295 = vadd.f32 %v1082, %v1294
      %v1296 = vpop.f32.mrf.mxu0
      %v1297 = vpop.f32.mrf.mxu0
      %v1298 = vadd.f32 %v1082, %v1297
      %v1299 = vpop.f32.mrf.mxu0
      %1300 = vmatprep.mubr.bf16.mxu0 0
      %1301 = vmatmul.mubr.bf16.gmra.mxu0 %v1171
      %v1302 = vpop.f32.mrf.mxu0
      %v1303 = vadd.f32 %v1082, %v1302
      %v1304 = vpop.f32.mrf.mxu0
      %v1305 = vpop.f32.mrf.mxu0
      %v1306 = vadd.f32 %v1082, %v1305
      %v1307 = vpop.f32.mrf.mxu0
      %1308 = vmatprep.mubr.bf16.mxu0 0
      %1309 = vmatmul.mubr.bf16.gmra.mxu0 %v1174
      %v1310 = vpop.f32.mrf.mxu0
      %v1311 = vadd.f32 %v1082, %v1310
      %v1312 = vpop.f32.mrf.mxu0
      %v1313 = vpop.f32.mrf.mxu0
      %v1314 = vadd.f32 %v1082, %v1313
      %v1315 = vpop.f32.mrf.mxu0
      %1316 = vmatprep.mubr.bf16.mxu0 0
      %1317 = vmatmul.mubr.bf16.gmra.mxu0 %v1177
      %v1318 = vpop.f32.mrf.mxu0
      %v1319 = vadd.f32 %v1082, %v1318
      %v1320 = vpop.f32.mrf.mxu0
      %v1321 = vpop.f32.mrf.mxu0
      %v1322 = vadd.f32 %v1082, %v1321
      %v1323 = vpop.f32.mrf.mxu0
      %1324 = vmatprep.mubr.bf16.mxu0 0
      %1325 = vmatmul.mubr.bf16.gmra.mxu0 %v1180
      %v1326 = vpop.f32.mrf.mxu0
      %v1327 = vadd.f32 %v1082, %v1326
      %v1328 = vpop.f32.mrf.mxu0
      %v1329 = vpop.f32.mrf.mxu0
      %v1330 = vadd.f32 %v1082, %v1329
      %v1331 = vpop.f32.mrf.mxu0
      %1332 = vmatprep.mubr.bf16.mxu0 0
      %1333 = vmatmul.mubr.bf16.gmra.mxu0 %v1183
      %v1334 = vpop.f32.mrf.mxu0
      %v1335 = vadd.f32 %v1082, %v1334
      %v1336 = vpop.f32.mrf.mxu0
      %v1337 = vpop.f32.mrf.mxu0
      %v1338 = vadd.f32 %v1082, %v1337
      %v1339 = vpop.f32.mrf.mxu0
      %1340 = vmatprep.mubr.bf16.mxu0 0
      %1341 = vmatmul.mubr.bf16.gmra.mxu0 %v1186
      %v1342 = vpop.f32.mrf.mxu0
      %v1343 = vadd.f32 %v1082, %v1342
      %v1344 = vpop.f32.mrf.mxu0
      %v1345 = vpop.f32.mrf.mxu0
      %v1346 = vadd.f32 %v1082, %v1345
      %v1347 = vpop.f32.mrf.mxu0
      %1348 = vdwg.mxu0
      %1349 = vst [vmem:[%s199] sm:$0xff] %v1223
      %1350 = vst [vmem:[%s199 + $0x8] sm:$0xff] %v1226
      %1351 = vst [vmem:[%s199 + $0x10] sm:$0xff] %v1231
      %1352 = vst [vmem:[%s199 + $0x18] sm:$0xff] %v1234
      %1353 = vst [vmem:[%s199 + $0x20] sm:$0xff] %v1239
      %1354 = vst [vmem:[%s199 + $0x28] sm:$0xff] %v1242
      %1355 = vst [vmem:[%s199 + $0x30] sm:$0xff] %v1247
      %1356 = vst [vmem:[%s199 + $0x38] sm:$0xff] %v1250
      %1357 = vst [vmem:[%s199 + $0x40] sm:$0xff] %v1255
      %1358 = vst [vmem:[%s199 + $0x48] sm:$0xff] %v1258
      %1359 = vst [vmem:[%s199 + $0x50] sm:$0xff] %v1263
      %1360 = vst [vmem:[%s199 + $0x58] sm:$0xff] %v1266
      %1361 = vst [vmem:[%s199 + $0x60] sm:$0xff] %v1271
      %1362 = vst [vmem:[%s199 + $0x68] sm:$0xff] %v1274
      %1363 = vst [vmem:[%s199 + $0x70] sm:$0xff] %v1279
      %1364 = vst [vmem:[%s199 + $0x78] sm:$0xff] %v1282
      %1365 = vst [vmem:[%s199 + $0x80] sm:$0xff] %v1287
      %1366 = vst [vmem:[%s199 + $0x88] sm:$0xff] %v1290
      %1367 = vst [vmem:[%s199 + $0x90] sm:$0xff] %v1295
      %1368 = vst [vmem:[%s199 + $0x98] sm:$0xff] %v1298
      %1369 = vst [vmem:[%s199 + $0xa0] sm:$0xff] %v1303
      %1370 = vst [vmem:[%s199 + $0xa8] sm:$0xff] %v1306
      %1371 = vst [vmem:[%s199 + $0xb0] sm:$0xff] %v1311
      %1372 = vst [vmem:[%s199 + $0xb8] sm:$0xff] %v1314
      %1373 = vst [vmem:[%s199 + $0xc0] sm:$0xff] %v1319
      %1374 = vst [vmem:[%s199 + $0xc8] sm:$0xff] %v1322
      %1375 = vst [vmem:[%s199 + $0xd0] sm:$0xff] %v1327
      %1376 = vst [vmem:[%s199 + $0xd8] sm:$0xff] %v1330
      %1377 = vst [vmem:[%s199 + $0xe0] sm:$0xff] %v1335
      %1378 = vst [vmem:[%s199 + $0xe8] sm:$0xff] %v1338
      %1379 = vst [vmem:[%s199 + $0xf0] sm:$0xff] %v1343
      %1380 = vst [vmem:[%s199 + $0xf8] sm:$0xff] %v1346
      %s1381 = smul.u32 32, %s15
      %p1382 = scmp.lt.s32.totalorder %s1381, 63
      %s1383 = scalar_select %p1382, %s1381, 63
      %s1384 = smul.addr %s1383, 8
      %s1385 = scalar_lea.vmem %s4, %s1384
      // Predicated region
      $region37: #{_mlp_forward.1} parent=35 // pred_check
        %p1386 = pneg %p122
      $region38: #{_mlp_forward.1} parent=35 // pred_check_branch
        %1388 = sbr.rel (%p1386) target = $region40
      $region39: #{_mlp_forward.1} parent=35 // pred_region
        %s1389 = smul.u32 32, %s15
      $region40: #{_mlp_forward.1} parent=35 // pred_fallthru
        _
    $region36: #{_mlp_forward.1} parent=5 // pred_fallthru
      _
    %p1390 = scmp.le.s32.totalorder 2, %s10
    // Predicated region
    $region41: #{_mlp_forward.1} parent=5 // pred_check
      %p1391 = pneg %p1390
    $region42: #{_mlp_forward.1} parent=5 // pred_check_branch
      %1393 = sbr.rel (%p1391) target = $region44
    $region43: #{_mlp_forward.1} parent=5 // pred_region
      %s1394 = ssub.s32 %s10, 2
      // Predicated region
      $region45: #{_mlp_forward.1} parent=43 // pred_check
        %p1395 = pneg %p128
      $region46: #{_mlp_forward.1} parent=43 // pred_check_branch
        %1397 = sbr.rel (%p1395) target = $region48
      $region47: #{_mlp_forward.1} parent=43 // pred_region
        %s1398 = smul.u32 32, %s16
        %p1399 = scmp.lt.s32.totalorder %s1398, 63
        %s1400 = scalar_select %p1399, %s1398, 63
        %s1401 = smul.addr %s1400, 8
        %s1402 = scalar_lea.vmem %s4, %s1401
      $region48: #{_mlp_forward.1} parent=43 // pred_fallthru
        _
    $region44: #{_mlp_forward.1} parent=5 // pred_fallthru
      _
  $region6: #{_mlp_forward.1} parent=0 // loop_footer
    %s14 = sadd.s32 1, %s10
  $region7: #{_mlp_forward.1} parent=0 // loop_footer_branch
    %9 = sbr.rel target = $region3
  $region8: #{_mlp_forward.1} parent=0 // loop_exit
    _

</llo_original>
